<compile_context>
chip_gen: v7x
topology: tpu7x:2x2x1
jax: 0.10.0
libtpu: 0.0.40
codegen_flags: <defaults>
</compile_context>

<pallas_src>
import jax
import jax.numpy as jnp
from jax.experimental import pallas as pl
from jax.experimental.pallas import tpu as pltpu


def _round_up(n, m):
    return ((n + m - 1) // m) * m


def hidden_layer_kernel(x_ref, w1_ref, b1_ref, wf1_ref, bf1_ref, wf2_ref, bf2_ref, o_ref):
    cdt = w1_ref.dtype                        # MXU operand dtype (bf16 by default)
    x = x_ref[...].astype(jnp.float32)

    # nn1: Linear(D, D) + residual ReLU (bias/ReLU/residual stay f32 on the VPU).
    out1 = jnp.dot(x.astype(cdt), w1_ref[...], preferred_element_type=jnp.float32)
    x = x + jnp.maximum(out1 + b1_ref[...], 0.0)

    # ffn: Linear(D, 4D) -> ReLU -> Linear(4D, D), then residual ReLU.
    x_c = x.astype(cdt)                       # single downcast reused as MXU operand
    h = jnp.dot(x_c, wf1_ref[...], preferred_element_type=jnp.float32)
    # Fuse bias + ReLU with the downcast: halves the (TB, 4D) temporary fed to the
    # second matmul (the VALU/vst hot spot at small D on v6e/v7x, and the first
    # thing that limits TB on v7x's 64 MiB VMEM).
    h = jnp.maximum(h + bf1_ref[...], 0.0).astype(cdt)
    ffn = jnp.dot(h, wf2_ref[...], preferred_element_type=jnp.float32)
    y = x + jnp.maximum(ffn + bf2_ref[...], 0.0)

    o_ref[...] = y.astype(o_ref.dtype)


def hidden_layer(x, w1, b1, wf1, bf1, wf2, bf2, *, block_b=512,
                 compute_dtype=jnp.bfloat16):
    """x: (B, D) float32. Weights in (in, out) layout, biases (1, out).

    Notes:
      * compute_dtype=jnp.bfloat16 uses MXU-native operands with f32 accumulation;
        pass jnp.float32 for a bit-faithful match of the f32 PyTorch module
        (doubles the resident-weight VMEM footprint).
      * Full MXU utilization on v6e/v7x (2x256^2 arrays) needs D to be a multiple
        of 256; at D=128 each matmul underfills the array regardless of tiling.
        Keep block_b >= 256 so at least the batch (M) dim keeps it streaming
        (on v5e's 128x128 MXU, D=128 is already native).
    """
    B, D = x.shape
    H = wf1.shape[1]                                    # 4 * D

    # MXU operands in compute_dtype; biases (and all VPU work) in f32.
    w1c, wf1c, wf2c = (w.astype(compute_dtype) for w in (w1, wf1, wf2))
    b1c, bf1c, bf2c = (b.astype(jnp.float32) for b in (b1, bf1, bf2))

    # Batch tile: multiple of 8 sublanes; pad B so the grid divides evenly.
    tb = min(block_b, _round_up(B, 8))
    bp = _round_up(B, tb)
    xp = x if bp == B else jnp.pad(x, ((0, bp - B), (0, 0)))

    # Streamed (auto double-buffered) activation tiles.
    act_spec = pl.BlockSpec((tb, D), lambda i: (i, 0))
    # Constant index_map => fetched once & resident across grid steps; Buffered(1)
    # drops the useless second pipeline buffer and halves the weight VMEM footprint.
    res = lambda a: pl.BlockSpec(a.shape, lambda i: (0, 0),
                                 pipeline_mode=pl.Buffered(1))

    weight_bytes = sum(a.size * a.dtype.itemsize
                       for a in (w1c, b1c, wf1c, bf1c, wf2c, bf2c))
    flops = 2 * bp * (D * D + 2 * D * H)                # = 18 * B * D^2
    bytes_accessed = xp.size * 4 + weight_bytes + bp * D * 4

    # Generation-aware VMEM budget: ~85% of this chip's physical VMEM
    # (~109 MiB on v5e/v6e, ~54 MiB on v7x).
    try:
        vmem_cap = pltpu.get_tpu_info().vmem_capacity_bytes
    except Exception:                                   # pragma: no cover (non-TPU)
        vmem_cap = 64 << 20
    vmem_est = (weight_bytes                            # single-buffered weights/biases
                + 4 * tb * D * 4                        # double-buffered in/out act tiles
                + tb * H * 6                            # f32 hidden acc + bf16 hidden operand
                + (4 << 20))                            # scratch / headroom
    vmem_limit = int(min(max(vmem_est, 8 << 20), int(0.85 * vmem_cap)))

    out = pl.pallas_call(
        hidden_layer_kernel,
        out_shape=jax.ShapeDtypeStruct((bp, D), x.dtype),
        grid=(bp // tb,),
        in_specs=[act_spec, res(w1c), res(b1c), res(wf1c), res(bf1c),
                  res(wf2c), res(bf2c)],
        out_specs=act_spec,
        compiler_params=pltpu.CompilerParams(
            dimension_semantics=("parallel",),
            vmem_limit_bytes=vmem_limit,
        ),
        cost_estimate=pl.CostEstimate(
            flops=flops, transcendentals=0, bytes_accessed=bytes_accessed),
    )(xp, w1c, b1c, wf1c, bf1c, wf2c, bf2c)
    return out[:B]


def init_params(key, emb_dim, dtype=jnp.float32):
    """PyTorch-style Linear init U(-1/sqrt(fan_in), 1/sqrt(fan_in)).
    Weights returned pre-transposed to (in, out); biases as (1, out)."""
    def linear(k, fan_in, fan_out):
        kw, kb = jax.random.split(k)
        bound = 1.0 / jnp.sqrt(jnp.array(fan_in, dtype))
        w = jax.random.uniform(kw, (fan_in, fan_out), dtype, -bound, bound)
        b = jax.random.uniform(kb, (1, fan_out), dtype, -bound, bound)
        return w, b

    k1, k2, k3 = jax.random.split(key, 3)
    w1, b1 = linear(k1, emb_dim, emb_dim)               # nn1
    wf1, bf1 = linear(k2, emb_dim, 4 * emb_dim)         # ffn[0]
    wf2, bf2 = linear(k3, 4 * emb_dim, emb_dim)         # ffn[2]
    return w1, b1, wf1, bf1, wf2, bf2


def reference(x, w1, b1, wf1, bf1, wf2, bf2, compute_dtype=jnp.bfloat16):
    """Pure-JAX reference. With compute_dtype=bf16 it mirrors the kernel's
    bf16-operand / f32-accum matmuls; with f32 it is the exact PyTorch module."""
    def dot(a, b):
        return jnp.dot(a.astype(compute_dtype), b.astype(compute_dtype),
                       preferred_element_type=jnp.float32)
    out1 = dot(x, w1) + b1
    x = x + jax.nn.relu(out1)
    h = jax.nn.relu(dot(x, wf1) + bf1)
    ffn = dot(h, wf2) + bf2
    return x + jax.nn.relu(ffn)


if __name__ == "__main__":
    key = jax.random.PRNGKey(0)
    kx, kp = jax.random.split(key)

    # Lane-dense emb_dim (multiple of 128). Batch is not a tile multiple so the
    # padding path is exercised; block_b=256 yields a 2-step "parallel" grid
    # (both v7x TensorCores get a tile) while amortizing per-step overhead.
    batch, emb_dim = 300, 128
    x = jax.random.normal(kx, (batch, emb_dim), jnp.float32)
    params = init_params(kp, emb_dim)

    y = hidden_layer(x, *params, block_b=256)
    y = jax.block_until_ready(y)

    y_ref_bf16 = reference(x, *params)                                 # matches kernel numerics
    y_ref_f32 = reference(x, *params, compute_dtype=jnp.float32)       # true f32 PyTorch module
    assert y.shape == (batch, emb_dim)
    assert jnp.allclose(y, y_ref_bf16, atol=1e-3, rtol=1e-3), "mismatch vs bf16 reference"
    assert jnp.allclose(y, y_ref_f32, atol=5e-2, rtol=5e-2), "mismatch vs f32 reference"

    print("KERNEL_OK")
</pallas_src>

<mosaic_0001>
module attributes {stable_mosaic.version = 11 : i64} {
  func.func @hidden_layer_kernel(%arg0: i32, %arg1: memref<256x128xf32, #tpu.memory_space<vmem>>, %arg2: memref<128x128xbf16, #tpu.memory_space<vmem>>, %arg3: memref<1x128xf32, #tpu.memory_space<vmem>>, %arg4: memref<128x512xbf16, #tpu.memory_space<vmem>>, %arg5: memref<1x512xf32, #tpu.memory_space<vmem>>, %arg6: memref<512x128xbf16, #tpu.memory_space<vmem>>, %arg7: memref<1x128xf32, #tpu.memory_space<vmem>>, %arg8: memref<256x128xf32, #tpu.memory_space<vmem>>) attributes {dimension_semantics = [#tpu.dimension_semantics<parallel>], iteration_bounds = array<i64: 2>, scalar_prefetch = 0 : i64, scratch_operands = 0 : i64, tpu.core_type = #tpu.core_type<tc>, window_params = [{transform_indices = @transform_0, window_bounds = array<i64: 256, 128>}, {pipeline_mode = #tpu.pipeline_mode<synchronous>, transform_indices = @transform_1, window_bounds = array<i64: 128, 128>}, {pipeline_mode = #tpu.pipeline_mode<synchronous>, transform_indices = @transform_2, window_bounds = array<i64: 1, 128>}, {pipeline_mode = #tpu.pipeline_mode<synchronous>, transform_indices = @transform_3, window_bounds = array<i64: 128, 512>}, {pipeline_mode = #tpu.pipeline_mode<synchronous>, transform_indices = @transform_4, window_bounds = array<i64: 1, 512>}, {pipeline_mode = #tpu.pipeline_mode<synchronous>, transform_indices = @transform_5, window_bounds = array<i64: 512, 128>}, {pipeline_mode = #tpu.pipeline_mode<synchronous>, transform_indices = @transform_6, window_bounds = array<i64: 1, 128>}, {transform_indices = @transform_7, window_bounds = array<i64: 256, 128>}]} {
    %c0 = arith.constant 0 : index
    %c0_0 = arith.constant 0 : index
    %0 = vector.load %arg1[%c0, %c0_0] : memref<256x128xf32, #tpu.memory_space<vmem>>, vector<256x128xf32>
    %1 = arith.truncf %0 : vector<256x128xf32> to vector<256x128xbf16>
    %c0_1 = arith.constant 0 : index
    %c0_2 = arith.constant 0 : index
    %2 = vector.load %arg2[%c0_1, %c0_2] : memref<128x128xbf16, #tpu.memory_space<vmem>>, vector<128x128xbf16>
    %cst = arith.constant dense<0.000000e+00> : vector<256x128xf32>
    %3 = tpu.matmul %1, %2, %cst {dimension_numbers = #tpu.dot_dimension_numbers<[1], [0], [0], [1], [0, 0, 1, 1], [], []>} : vector<256x128xbf16>, vector<128x128xbf16>, vector<256x128xf32> -> vector<256x128xf32>
    %c0_3 = arith.constant 0 : index
    %c0_4 = arith.constant 0 : index
    %4 = vector.load %arg3[%c0_3, %c0_4] : memref<1x128xf32, #tpu.memory_space<vmem>>, vector<1x128xf32>
    %5 = vector.broadcast %4 : vector<1x128xf32> to vector<256x128xf32>
    %6 = arith.addf %3, %5 : vector<256x128xf32>
    %cst_5 = arith.constant 0.000000e+00 : f32
    %7 = vector.broadcast %cst_5 : f32 to vector<256x128xf32>
    %8 = arith.maximumf %6, %7 : vector<256x128xf32>
    %9 = arith.addf %0, %8 : vector<256x128xf32>
    %10 = arith.truncf %9 : vector<256x128xf32> to vector<256x128xbf16>
    %c0_6 = arith.constant 0 : index
    %c0_7 = arith.constant 0 : index
    %11 = vector.load %arg4[%c0_6, %c0_7] : memref<128x512xbf16, #tpu.memory_space<vmem>>, vector<128x512xbf16>
    %cst_8 = arith.constant dense<0.000000e+00> : vector<256x512xf32>
    %12 = tpu.matmul %10, %11, %cst_8 {dimension_numbers = #tpu.dot_dimension_numbers<[1], [0], [0], [1], [0, 0, 1, 1], [], []>} : vector<256x128xbf16>, vector<128x512xbf16>, vector<256x512xf32> -> vector<256x512xf32>
    %c0_9 = arith.constant 0 : index
    %c0_10 = arith.constant 0 : index
    %13 = vector.load %arg5[%c0_9, %c0_10] : memref<1x512xf32, #tpu.memory_space<vmem>>, vector<1x512xf32>
    %14 = vector.broadcast %13 : vector<1x512xf32> to vector<256x512xf32>
    %15 = arith.addf %12, %14 : vector<256x512xf32>
    %cst_11 = arith.constant 0.000000e+00 : f32
    %16 = vector.broadcast %cst_11 : f32 to vector<256x512xf32>
    %17 = arith.maximumf %15, %16 : vector<256x512xf32>
    %18 = arith.truncf %17 : vector<256x512xf32> to vector<256x512xbf16>
    %c0_12 = arith.constant 0 : index
    %c0_13 = arith.constant 0 : index
    %19 = vector.load %arg6[%c0_12, %c0_13] : memref<512x128xbf16, #tpu.memory_space<vmem>>, vector<512x128xbf16>
    %cst_14 = arith.constant dense<0.000000e+00> : vector<256x128xf32>
    %20 = tpu.matmul %18, %19, %cst_14 {dimension_numbers = #tpu.dot_dimension_numbers<[1], [0], [0], [1], [0, 0, 1, 1], [], []>} : vector<256x512xbf16>, vector<512x128xbf16>, vector<256x128xf32> -> vector<256x128xf32>
    %c0_15 = arith.constant 0 : index
    %c0_16 = arith.constant 0 : index
    %21 = vector.load %arg7[%c0_15, %c0_16] : memref<1x128xf32, #tpu.memory_space<vmem>>, vector<1x128xf32>
    %22 = vector.broadcast %21 : vector<1x128xf32> to vector<256x128xf32>
    %23 = arith.addf %20, %22 : vector<256x128xf32>
    %cst_17 = arith.constant 0.000000e+00 : f32
    %24 = vector.broadcast %cst_17 : f32 to vector<256x128xf32>
    %25 = arith.maximumf %23, %24 : vector<256x128xf32>
    %26 = arith.addf %9, %25 : vector<256x128xf32>
    %c0_18 = arith.constant 0 : index
    %c0_19 = arith.constant 0 : index
    %27 = vector.load %arg8[%c0_18, %c0_19] : memref<256x128xf32, #tpu.memory_space<vmem>>, vector<256x128xf32>
    tpu.vector_store %arg8[%c0_18, %c0_19], %26 {strides = array<i32>} : memref<256x128xf32, #tpu.memory_space<vmem>>, vector<256x128xf32>,
    return
  }
  func.func @transform_0(%arg0: i32) -> (i32, i32) {
    %c0_i32 = arith.constant 0 : i32
    %c0_i32_0 = arith.constant 0 : i32
    return %arg0, %c0_i32 : i32, i32
  }
  func.func @transform_1(%arg0: i32) -> (i32, i32) {
    %c0_i32 = arith.constant 0 : i32
    %c0_i32_0 = arith.constant 0 : i32
    %c0_i32_1 = arith.constant 0 : i32
    return %c0_i32, %c0_i32_0 : i32, i32
  }
  func.func @transform_2(%arg0: i32) -> (i32, i32) {
    %c0_i32 = arith.constant 0 : i32
    %c0_i32_0 = arith.constant 0 : i32
    %c0_i32_1 = arith.constant 0 : i32
    return %c0_i32, %c0_i32_0 : i32, i32
  }
  func.func @transform_3(%arg0: i32) -> (i32, i32) {
    %c0_i32 = arith.constant 0 : i32
    %c0_i32_0 = arith.constant 0 : i32
    %c0_i32_1 = arith.constant 0 : i32
    return %c0_i32, %c0_i32_0 : i32, i32
  }
  func.func @transform_4(%arg0: i32) -> (i32, i32) {
    %c0_i32 = arith.constant 0 : i32
    %c0_i32_0 = arith.constant 0 : i32
    %c0_i32_1 = arith.constant 0 : i32
    return %c0_i32, %c0_i32_0 : i32, i32
  }
  func.func @transform_5(%arg0: i32) -> (i32, i32) {
    %c0_i32 = arith.constant 0 : i32
    %c0_i32_0 = arith.constant 0 : i32
    %c0_i32_1 = arith.constant 0 : i32
    return %c0_i32, %c0_i32_0 : i32, i32
  }
  func.func @transform_6(%arg0: i32) -> (i32, i32) {
    %c0_i32 = arith.constant 0 : i32
    %c0_i32_0 = arith.constant 0 : i32
    %c0_i32_1 = arith.constant 0 : i32
    return %c0_i32, %c0_i32_0 : i32, i32
  }
  func.func @transform_7(%arg0: i32) -> (i32, i32) {
    %c0_i32 = arith.constant 0 : i32
    %c0_i32_0 = arith.constant 0 : i32
    return %arg0, %c0_i32 : i32, i32
  }
}

</mosaic_0001>

<llo_original>
// kernel: tpu_custom_call.1
$region0: #{tpu_custom_call.1}
  #allocation0 [shape = 'u32[]', space=smem, size = 0x4, offset = 0x4, fixed_abs, tag = 'smem constant byte address 0x4 - core index']
  #allocation1 [shape = 'u32[144,128]{1,0:T(1,128)}', space=vmem, size = 0x12000, scoped, tag = 'internal scratch']
  %s0 = inlined_call_operand.hbm [shape: f32[512,128], index: 0, kind: input, shape index: {}]
  %s1 = inlined_call_operand.hbm [shape: bf16[128,128], index: 1, kind: input, shape index: {}]
  %s2 = inlined_call_operand.vmem [shape: f32[1,128], index: 2, kind: input, shape index: {}]
  %s3 = inlined_call_operand.hbm [shape: bf16[128,512], index: 3, kind: input, shape index: {}]
  %s4 = inlined_call_operand.vmem [shape: f32[1,512], index: 4, kind: input, shape index: {}]
  %s5 = inlined_call_operand.hbm [shape: bf16[512,128], index: 5, kind: input, shape index: {}]
  %s6 = inlined_call_operand.vmem [shape: f32[1,128], index: 6, kind: input, shape index: {}]
  %s7 = inlined_call_operand.hbm [shape: f32[512,128], index: 7, kind: output, shape index: {}]
  %s8 = sld [smem:[#allocation0]]
  $region77: #{tpu_custom_call.1} parent=0
    _
  %s10 = ssub.s32 1, %s8
  %s11 = scalar_select 0, %s10, %s8
  $region1: #{tpu_custom_call.1} parent=0
    #allocation2 [shape = 'u8[262144]{0}', space=vmem, size = 0x40000, scoped, tag = 'input window, operand 0']
    #allocation3 [shape = 's32[2]{0}', space=sflag, size = 0x8, scoped, tag = 'scoped memory for tpu_custom_call.1']
    #allocation4 [shape = 's32[2]{0}', space=sflag, size = 0x8, scoped, tag = 'scoped memory for tpu_custom_call.1']
    #allocation5 [shape = 'u8[32768]{0}', space=vmem, size = 0x8000, scoped, tag = 'input window, operand 1, single buffered']
    #allocation6 [shape = 's32[1]{0}', space=sflag, size = 0x4, scoped, tag = 'scoped memory for tpu_custom_call.1']
    #allocation7 [shape = 'u8[131072]{0}', space=vmem, size = 0x20000, scoped, tag = 'input window, operand 3, single buffered']
    #allocation8 [shape = 'u8[131072]{0}', space=vmem, size = 0x20000, scoped, tag = 'input window, operand 5, single buffered']
    #allocation9 [shape = 's32[1]{0}', space=sflag, size = 0x4, scoped, tag = 'scoped memory for tpu_custom_call.1']
    #allocation10 [shape = 'u8[262144]{0}', space=vmem, size = 0x40000, scoped, tag = 'output window, operand 0']
    %12 = vsyncpa [#allocation3], 0
    %s13 = scalar_lea.sflag [#allocation3], 1
    %14 = vsyncpa %s13, 0
    %15 = vsyncpa [#allocation6], 0
    %16 = vsyncpa [#allocation9], 0
    %17 = vsyncpa [#allocation4], 0
    %s18 = scalar_lea.sflag [#allocation4], 1
    %19 = vsyncpa %s18, 0
    loop: start=0, step=1, limit=4
    $region2: #{tpu_custom_call.1} parent=1 // loop_pre_header
      _
    $region3: #{tpu_custom_call.1} parent=1 // loop_header
      %s21 = sphi 0, %s25
      %p22 = scmp.ge.s32.totalorder %s21, 4
      %s31 = sphi 0, %s33
      %s34 = sphi 0, %s31
      %s35 = sphi 0, %s34
      %s51 = sphi 0, %s35
      %s55 = sphi 0, %s55
      %s57 = sphi 0, %s55
      %s58 = sphi 0, %s57
      %s72 = sphi 0, %s58
      %s76 = sphi 0, %s76
      %s78 = sphi 0, %s76
      %s79 = sphi 0, %s78
      %s93 = sphi 0, %s79
      %s97 = sphi 0, %s97
      %s99 = sphi 0, %s97
      %s100 = sphi 0, %s99
      %s114 = sphi 0, %s100
      %s118 = sphi 0, %s118
      %s120 = sphi 0, %s118
      %s121 = sphi 0, %s120
      %s135 = sphi 0, %s121
      %s139 = sphi 0, %s139
      %s141 = sphi 0, %s139
      %s142 = sphi 0, %s141
      %s156 = sphi 0, %s142
      %s160 = sphi 0, %s160
      %s162 = sphi 0, %s160
      %s163 = sphi 0, %s162
      %s177 = sphi 0, %s163
      %s183 = sphi 0, %s185
      %s186 = sphi 0, %s183
      %s187 = sphi 0, %s186
      %s203 = sphi 0, %s187
    $region4: #{tpu_custom_call.1} parent=1 // loop_header_branch
      %24 = sbr.rel (%p22) target = $region8
    $region5: #{tpu_custom_call.1} parent=1 // loop_body
      %s26 = ssub.s32 %s21, 1
      %s27 = ssub.s32 %s21, 2
      %s28 = sadd.s32 %s21, 1
      %s29 = ssub.s32 %s21, %s28
      %p30 = scmp.eq.s32.totalorder %s29, 0
      %s32 = sadd.s32 %s31, 1
      %s33 = scalar_select %p30, %s31, %s32
      %p36 = pneg %p30
      %p37 = scmp.eq.s32.totalorder %s21, 1
      %p38 = por %p36, %p37
      %p39 = scmp.ne.s32.totalorder %s31, %s34
      %p40 = scmp.eq.s32.totalorder %s21, 0
      %p41 = por %p39, %p40
      %p42 = scmp.ne.s32.totalorder %s31, %s34
      %p43 = scmp.eq.s32.totalorder %s26, 1
      %p44 = por %p42, %p43
      %p45 = scmp.ne.s32.totalorder %s34, %s35
      %p46 = scmp.eq.s32.totalorder %s26, 0
      %p47 = por %p45, %p46
      %p48 = scmp.ne.s32.totalorder %s34, %s35
      %p49 = scmp.eq.s32.totalorder %s27, 1
      %p50 = por %p48, %p49
      %p52 = scmp.ne.s32.totalorder %s35, %s51
      %p53 = scmp.eq.s32.totalorder %s27, 0
      %p54 = por %p52, %p53
      %s56 = sadd.s32 %s55, 1
      %p59 = scmp.eq.s32.totalorder %s21, 1
      %p60 = scmp.ne.s32.totalorder %s55, %s57
      %p61 = scmp.eq.s32.totalorder %s21, 0
      %p62 = por %p60, %p61
      %p63 = scmp.ne.s32.totalorder %s55, %s57
      %p64 = scmp.eq.s32.totalorder %s26, 1
      %p65 = por %p63, %p64
      %p66 = scmp.ne.s32.totalorder %s57, %s58
      %p67 = scmp.eq.s32.totalorder %s26, 0
      %p68 = por %p66, %p67
      %p69 = scmp.ne.s32.totalorder %s57, %s58
      %p70 = scmp.eq.s32.totalorder %s27, 1
      %p71 = por %p69, %p70
      %p73 = scmp.ne.s32.totalorder %s58, %s72
      %p74 = scmp.eq.s32.totalorder %s27, 0
      %p75 = por %p73, %p74
      %s77 = sadd.s32 %s76, 1
      %p80 = scmp.eq.s32.totalorder %s21, 1
      %p81 = scmp.ne.s32.totalorder %s76, %s78
      %p82 = scmp.eq.s32.totalorder %s21, 0
      %p83 = por %p81, %p82
      %p84 = scmp.ne.s32.totalorder %s76, %s78
      %p85 = scmp.eq.s32.totalorder %s26, 1
      %p86 = por %p84, %p85
      %p87 = scmp.ne.s32.totalorder %s78, %s79
      %p88 = scmp.eq.s32.totalorder %s26, 0
      %p89 = por %p87, %p88
      %p90 = scmp.ne.s32.totalorder %s78, %s79
      %p91 = scmp.eq.s32.totalorder %s27, 1
      %p92 = por %p90, %p91
      %p94 = scmp.ne.s32.totalorder %s79, %s93
      %p95 = scmp.eq.s32.totalorder %s27, 0
      %p96 = por %p94, %p95
      %s98 = sadd.s32 %s97, 1
      %p101 = scmp.eq.s32.totalorder %s21, 1
      %p102 = scmp.ne.s32.totalorder %s97, %s99
      %p103 = scmp.eq.s32.totalorder %s21, 0
      %p104 = por %p102, %p103
      %p105 = scmp.ne.s32.totalorder %s97, %s99
      %p106 = scmp.eq.s32.totalorder %s26, 1
      %p107 = por %p105, %p106
      %p108 = scmp.ne.s32.totalorder %s99, %s100
      %p109 = scmp.eq.s32.totalorder %s26, 0
      %p110 = por %p108, %p109
      %p111 = scmp.ne.s32.totalorder %s99, %s100
      %p112 = scmp.eq.s32.totalorder %s27, 1
      %p113 = por %p111, %p112
      %p115 = scmp.ne.s32.totalorder %s100, %s114
      %p116 = scmp.eq.s32.totalorder %s27, 0
      %p117 = por %p115, %p116
      %s119 = sadd.s32 %s118, 1
      %p122 = scmp.eq.s32.totalorder %s21, 1
      %p123 = scmp.ne.s32.totalorder %s118, %s120
      %p124 = scmp.eq.s32.totalorder %s21, 0
      %p125 = por %p123, %p124
      %p126 = scmp.ne.s32.totalorder %s118, %s120
      %p127 = scmp.eq.s32.totalorder %s26, 1
      %p128 = por %p126, %p127
      %p129 = scmp.ne.s32.totalorder %s120, %s121
      %p130 = scmp.eq.s32.totalorder %s26, 0
      %p131 = por %p129, %p130
      %p132 = scmp.ne.s32.totalorder %s120, %s121
      %p133 = scmp.eq.s32.totalorder %s27, 1
      %p134 = por %p132, %p133
      %p136 = scmp.ne.s32.totalorder %s121, %s135
      %p137 = scmp.eq.s32.totalorder %s27, 0
      %p138 = por %p136, %p137
      %s140 = sadd.s32 %s139, 1
      %p143 = scmp.eq.s32.totalorder %s21, 1
      %p144 = scmp.ne.s32.totalorder %s139, %s141
      %p145 = scmp.eq.s32.totalorder %s21, 0
      %p146 = por %p144, %p145
      %p147 = scmp.ne.s32.totalorder %s139, %s141
      %p148 = scmp.eq.s32.totalorder %s26, 1
      %p149 = por %p147, %p148
      %p150 = scmp.ne.s32.totalorder %s141, %s142
      %p151 = scmp.eq.s32.totalorder %s26, 0
      %p152 = por %p150, %p151
      %p153 = scmp.ne.s32.totalorder %s141, %s142
      %p154 = scmp.eq.s32.totalorder %s27, 1
      %p155 = por %p153, %p154
      %p157 = scmp.ne.s32.totalorder %s142, %s156
      %p158 = scmp.eq.s32.totalorder %s27, 0
      %p159 = por %p157, %p158
      %s161 = sadd.s32 %s160, 1
      %p164 = scmp.eq.s32.totalorder %s21, 1
      %p165 = scmp.ne.s32.totalorder %s160, %s162
      %p166 = scmp.eq.s32.totalorder %s21, 0
      %p167 = por %p165, %p166
      %p168 = scmp.ne.s32.totalorder %s160, %s162
      %p169 = scmp.eq.s32.totalorder %s26, 1
      %p170 = por %p168, %p169
      %p171 = scmp.ne.s32.totalorder %s162, %s163
      %p172 = scmp.eq.s32.totalorder %s26, 0
      %p173 = por %p171, %p172
      %p174 = scmp.ne.s32.totalorder %s162, %s163
      %p175 = scmp.eq.s32.totalorder %s27, 1
      %p176 = por %p174, %p175
      %p178 = scmp.ne.s32.totalorder %s163, %s177
      %p179 = scmp.eq.s32.totalorder %s27, 0
      %p180 = por %p178, %p179
      %s181 = ssub.s32 %s21, %s28
      %p182 = scmp.eq.s32.totalorder %s181, 0
      %s184 = sadd.s32 %s183, 1
      %s185 = scalar_select %p182, %s183, %s184
      %p188 = pneg %p182
      %p189 = scmp.eq.s32.totalorder %s21, 1
      %p190 = por %p188, %p189
      %p191 = scmp.ne.s32.totalorder %s183, %s186
      %p192 = scmp.eq.s32.totalorder %s21, 0
      %p193 = por %p191, %p192
      %p194 = scmp.ne.s32.totalorder %s183, %s186
      %p195 = scmp.eq.s32.totalorder %s26, 1
      %p196 = por %p194, %p195
      %p197 = scmp.ne.s32.totalorder %s186, %s187
      %p198 = scmp.eq.s32.totalorder %s26, 0
      %p199 = por %p197, %p198
      %p200 = scmp.ne.s32.totalorder %s186, %s187
      %p201 = scmp.eq.s32.totalorder %s27, 1
      %p202 = por %p200, %p201
      %p204 = scmp.ne.s32.totalorder %s187, %s203
      %p205 = scmp.eq.s32.totalorder %s27, 0
      %p206 = por %p204, %p205
      %p207 = scmp.le.s32.totalorder 1, %s21
      %p208 = scmp.lt.s32.totalorder %s21, 3
      %p209 = pnand %p207, %p208
      %p210 = pneg %p209
      // Predicated region
      $region9: #{tpu_custom_call.1} parent=5 // pred_check
        _
      $region10: #{tpu_custom_call.1} parent=5 // pred_check_branch
        %212 = sbr.rel (%p209) target = $region12
      $region11: #{tpu_custom_call.1} parent=5 // pred_region
        %s213 = ssub.s32 %s21, 1
        // Predicated region
        $region13: #{tpu_custom_call.1} parent=11 // pred_check
          %p214 = pneg %p68
        $region14: #{tpu_custom_call.1} parent=11 // pred_check_branch
          %216 = sbr.rel (%p214) target = $region16
        $region15: #{tpu_custom_call.1} parent=11 // pred_region
          %s218 = ssub.s32 1024, 1024
          %219 = vsyncadd [#allocation6], %s218
          %s220 = sshll.u32 [#allocation5], 4
          %s221 = int_to_ptr.vmem [resolvable:$true] %s220
          %226 = dma.hbm_to_vmem [thread:$0]  %s1, 1024, %s221, [#allocation6], 64, 64, 4
        $region16: #{tpu_custom_call.1} parent=11 // pred_fallthru
          _
        // Predicated region
        $region17: #{tpu_custom_call.1} parent=11 // pred_check
          %p227 = pneg %p89
        $region18: #{tpu_custom_call.1} parent=11 // pred_check_branch
          %229 = sbr.rel (%p227) target = $region20
        $region19: #{tpu_custom_call.1} parent=11 // pred_region
          _
        $region20: #{tpu_custom_call.1} parent=11 // pred_fallthru
          _
        // Predicated region
        $region21: #{tpu_custom_call.1} parent=11 // pred_check
          %p230 = pneg %p110
        $region22: #{tpu_custom_call.1} parent=11 // pred_check_branch
          %232 = sbr.rel (%p230) target = $region24
        $region23: #{tpu_custom_call.1} parent=11 // pred_region
          %s234 = ssub.s32 4096, 4096
          %235 = vsyncadd [#allocation6], %s234
          %s236 = sshll.u32 [#allocation7], 4
          %s237 = int_to_ptr.vmem [resolvable:$true] %s236
          %242 = dma.hbm_to_vmem [thread:$0]  %s3, 4096, %s237, [#allocation6], 256, 256, 16
        $region24: #{tpu_custom_call.1} parent=11 // pred_fallthru
          _
        // Predicated region
        $region25: #{tpu_custom_call.1} parent=11 // pred_check
          %p243 = pneg %p131
        $region26: #{tpu_custom_call.1} parent=11 // pred_check_branch
          %245 = sbr.rel (%p243) target = $region28
        $region27: #{tpu_custom_call.1} parent=11 // pred_region
          _
        $region28: #{tpu_custom_call.1} parent=11 // pred_fallthru
          _
        // Predicated region
        $region29: #{tpu_custom_call.1} parent=11 // pred_check
          %p246 = pneg %p152
        $region30: #{tpu_custom_call.1} parent=11 // pred_check_branch
          %248 = sbr.rel (%p246) target = $region32
        $region31: #{tpu_custom_call.1} parent=11 // pred_region
          %s250 = ssub.s32 4096, 4096
          %251 = vsyncadd [#allocation9], %s250
          %s252 = sshll.u32 [#allocation8], 4
          %s253 = int_to_ptr.vmem [resolvable:$true] %s252
          %258 = dma.hbm_to_vmem [thread:$0]  %s5, 4096, %s253, [#allocation9], 64, 64, 4
        $region32: #{tpu_custom_call.1} parent=11 // pred_fallthru
          _
        // Predicated region
        $region33: #{tpu_custom_call.1} parent=11 // pred_check
          %p259 = pneg %p173
        $region34: #{tpu_custom_call.1} parent=11 // pred_check_branch
          %261 = sbr.rel (%p259) target = $region36
        $region35: #{tpu_custom_call.1} parent=11 // pred_region
          _
        $region36: #{tpu_custom_call.1} parent=11 // pred_fallthru
          _
      $region12: #{tpu_custom_call.1} parent=5 // pred_fallthru
        _
      %p262 = scmp.lt.s32.totalorder %s21, 2
      // Predicated region
      $region37: #{tpu_custom_call.1} parent=5 // pred_check
        %p263 = pneg %p262
      $region38: #{tpu_custom_call.1} parent=5 // pred_check_branch
        %265 = sbr.rel (%p263) target = $region40
      $region39: #{tpu_custom_call.1} parent=5 // pred_region
        // Predicated region
        $region41: #{tpu_custom_call.1} parent=39 // pred_check
          %p266 = pneg %p41
        $region42: #{tpu_custom_call.1} parent=39 // pred_check_branch
          %268 = sbr.rel (%p266) target = $region44
        $region43: #{tpu_custom_call.1} parent=39 // pred_region
          %s269 = sand.u32 %s31, 1
          %s270 = scalar_lea.sflag [#allocation3], %s269
          %s271 = sand.u32 %s31, 1
          %s272 = smul.addr %s271, 256
          %s273 = scalar_lea.vmem [#allocation2], %s272
          %s274 = smul.u32 32, %s21
          %s276 = ssub.s32 4096, 4096
          %277 = vsyncadd %s270, %s276
          %s278 = smul.addr %s274, 128
          %s279 = scalar_lea.hbm %s0, %s278
          %s280 = sshll.u32 %s273, 4
          %s281 = int_to_ptr.vmem [resolvable:$true] %s280
          %286 = dma.hbm_to_vmem [thread:$0]  %s279, 4096, %s281, %s270, 128, 128, 8
        $region44: #{tpu_custom_call.1} parent=39 // pred_fallthru
          _
      $region40: #{tpu_custom_call.1} parent=5 // pred_fallthru
        _
      %p287 = scmp.le.s32.totalorder 1, %s21
      %p288 = scmp.lt.s32.totalorder %s21, 3
      %p289 = pnand %p287, %p288
      %p290 = pneg %p289
      // Predicated region
      $region45: #{tpu_custom_call.1} parent=5 // pred_check
        _
      $region46: #{tpu_custom_call.1} parent=5 // pred_check_branch
        %292 = sbr.rel (%p289) target = $region48
      $region47: #{tpu_custom_call.1} parent=5 // pred_region
        %s293 = ssub.s32 %s21, 1
        %s294 = sand.u32 %s34, 1
        %s295 = scalar_lea.sflag [#allocation3], %s294
        %s296 = sand.u32 %s34, 1
        %s297 = smul.addr %s296, 256
        %s298 = scalar_lea.vmem [#allocation2], %s297
        // Predicated region
        $region49: #{tpu_custom_call.1} parent=47 // pred_check
          %p299 = pneg %p47
        $region50: #{tpu_custom_call.1} parent=47 // pred_check_branch
          %301 = sbr.rel (%p299) target = $region52
        $region51: #{tpu_custom_call.1} parent=47 // pred_region
          %302 = dma.done %s295, 4096
        $region52: #{tpu_custom_call.1} parent=47 // pred_fallthru
          _
        // Predicated region
        $region53: #{tpu_custom_call.1} parent=47 // pred_check
          %p303 = pneg %p68
        $region54: #{tpu_custom_call.1} parent=47 // pred_check_branch
          %305 = sbr.rel (%p303) target = $region56
        $region55: #{tpu_custom_call.1} parent=47 // pred_region
          %306 = dma.done [#allocation6], 1024
        $region56: #{tpu_custom_call.1} parent=47 // pred_fallthru
          _
        // Predicated region
        $region57: #{tpu_custom_call.1} parent=47 // pred_check
          %p307 = pneg %p110
        $region58: #{tpu_custom_call.1} parent=47 // pred_check_branch
          %309 = sbr.rel (%p307) target = $region60
        $region59: #{tpu_custom_call.1} parent=47 // pred_region
          %310 = dma.done [#allocation6], 4096
        $region60: #{tpu_custom_call.1} parent=47 // pred_fallthru
          _
        // Predicated region
        $region61: #{tpu_custom_call.1} parent=47 // pred_check
          %p311 = pneg %p152
        $region62: #{tpu_custom_call.1} parent=47 // pred_check_branch
          %313 = sbr.rel (%p311) target = $region64
        $region63: #{tpu_custom_call.1} parent=47 // pred_region
          %314 = dma.done [#allocation9], 4096
        $region64: #{tpu_custom_call.1} parent=47 // pred_fallthru
          _
        %s315 = sand.u32 %s34, 1
        %s316 = scalar_lea.sflag [#allocation3], %s315
        %s317 = sand.u32 %s34, 1
        %s318 = smul.addr %s317, 256
        %s319 = scalar_lea.vmem [#allocation2], %s318
        %p320 = pneg %p47
        %p321 = pneg %p44
        %p322 = pneg %p68
        %p323 = pneg %p65
        %p324 = pneg %p89
        %p325 = pneg %p86
        %p326 = pneg %p110
        %p327 = pneg %p107
        %p328 = pneg %p131
        %p329 = pneg %p128
        %p330 = pneg %p152
        %p331 = pneg %p149
        %p332 = pneg %p173
        %p333 = pneg %p170
        %p334 = pneg %p199
        %p335 = pneg %p196
        %s336 = sand.u32 %s186, 1
        %s337 = scalar_lea.sflag [#allocation4], %s336
        %s338 = sand.u32 %s186, 1
        %s339 = smul.addr %s338, 256
        %s340 = scalar_lea.vmem [#allocation10], %s339
        %s341 = smul.u32 32, %s26
        %s342 = smul.u32 32, %s26
        %v344 = vld [vmem:[%s298] sm:$0xff]
        %v345 = vld [vmem:[%s298 + $0x8] sm:$0xff]
        %v346 = vld [vmem:[%s298 + $0x10] sm:$0xff]
        %v347 = vld [vmem:[%s298 + $0x18] sm:$0xff]
        %v348 = vld [vmem:[%s298 + $0x20] sm:$0xff]
        %v349 = vld [vmem:[%s298 + $0x28] sm:$0xff]
        %v350 = vld [vmem:[%s298 + $0x30] sm:$0xff]
        %v351 = vld [vmem:[%s298 + $0x38] sm:$0xff]
        %v352 = vld [vmem:[%s298 + $0x40] sm:$0xff]
        %v353 = vld [vmem:[%s298 + $0x48] sm:$0xff]
        %v354 = vld [vmem:[%s298 + $0x50] sm:$0xff]
        %v355 = vld [vmem:[%s298 + $0x58] sm:$0xff]
        %v356 = vld [vmem:[%s298 + $0x60] sm:$0xff]
        %v357 = vld [vmem:[%s298 + $0x68] sm:$0xff]
        %v358 = vld [vmem:[%s298 + $0x70] sm:$0xff]
        %v359 = vld [vmem:[%s298 + $0x78] sm:$0xff]
        %v360 = vld [vmem:[%s298 + $0x80] sm:$0xff]
        %v361 = vld [vmem:[%s298 + $0x88] sm:$0xff]
        %v362 = vld [vmem:[%s298 + $0x90] sm:$0xff]
        %v363 = vld [vmem:[%s298 + $0x98] sm:$0xff]
        %v364 = vld [vmem:[%s298 + $0xa0] sm:$0xff]
        %v365 = vld [vmem:[%s298 + $0xa8] sm:$0xff]
        %v366 = vld [vmem:[%s298 + $0xb0] sm:$0xff]
        %v367 = vld [vmem:[%s298 + $0xb8] sm:$0xff]
        %v368 = vld [vmem:[%s298 + $0xc0] sm:$0xff]
        %v369 = vld [vmem:[%s298 + $0xc8] sm:$0xff]
        %v370 = vld [vmem:[%s298 + $0xd0] sm:$0xff]
        %v371 = vld [vmem:[%s298 + $0xd8] sm:$0xff]
        %v372 = vld [vmem:[%s298 + $0xe0] sm:$0xff]
        %v373 = vld [vmem:[%s298 + $0xe8] sm:$0xff]
        %v374 = vld [vmem:[%s298 + $0xf0] sm:$0xff]
        %v375 = vld [vmem:[%s298 + $0xf8] sm:$0xff]
        %v376 = vpack.c.bf16 %v345, %v344
        %v377 = vpack.c.bf16 %v347, %v346
        %v378 = vpack.c.bf16 %v349, %v348
        %v379 = vpack.c.bf16 %v351, %v350
        %v380 = vpack.c.bf16 %v353, %v352
        %v381 = vpack.c.bf16 %v355, %v354
        %v382 = vpack.c.bf16 %v357, %v356
        %v383 = vpack.c.bf16 %v359, %v358
        %v384 = vpack.c.bf16 %v361, %v360
        %v385 = vpack.c.bf16 %v363, %v362
        %v386 = vpack.c.bf16 %v365, %v364
        %v387 = vpack.c.bf16 %v367, %v366
        %v388 = vpack.c.bf16 %v369, %v368
        %v389 = vpack.c.bf16 %v371, %v370
        %v390 = vpack.c.bf16 %v373, %v372
        %v391 = vpack.c.bf16 %v375, %v374
        %v392 = vld [vmem:[#allocation5] sm:$0xf]
        %v393 = vld [vmem:[#allocation5 + $0x4] sm:$0xf]
        %v394 = vld [vmem:[#allocation5 + $0x8] sm:$0xf]
        %v395 = vld [vmem:[#allocation5 + $0xc] sm:$0xf]
        %v396 = vld [vmem:[#allocation5 + $0x10] sm:$0xf]
        %v397 = vld [vmem:[#allocation5 + $0x14] sm:$0xf]
        %v398 = vld [vmem:[#allocation5 + $0x18] sm:$0xf]
        %v399 = vld [vmem:[#allocation5 + $0x1c] sm:$0xf]
        %v400 = vld [vmem:[#allocation5 + $0x20] sm:$0xf]
        %v401 = vld [vmem:[#allocation5 + $0x24] sm:$0xf]
        %v402 = vld [vmem:[#allocation5 + $0x28] sm:$0xf]
        %v403 = vld [vmem:[#allocation5 + $0x2c] sm:$0xf]
        %v404 = vld [vmem:[#allocation5 + $0x30] sm:$0xf]
        %v405 = vld [vmem:[#allocation5 + $0x34] sm:$0xf]
        %v406 = vld [vmem:[#allocation5 + $0x38] sm:$0xf]
        %v407 = vld [vmem:[#allocation5 + $0x3c] sm:$0xf]
        %v408 = vld [vmem:[%s2] sm:$0x1]
        %v410 = vlaneseq
        %v411 = vshrl.u32 %v410, 7
        %v412 = vsub.s32 0, %v411
        %v413 = vrot.slane %v408, %v412
        %v431 = vunpack.c.l.b16 %v392
        %v432 = vunpack.c.l.b16 %v393
        %v433 = vunpack.c.l.b16 %v394
        %v434 = vunpack.c.l.b16 %v395
        %v435 = vunpack.c.l.b16 %v396
        %v436 = vunpack.c.l.b16 %v397
        %v437 = vunpack.c.l.b16 %v398
        %v438 = vunpack.c.l.b16 %v399
        %v439 = vunpack.c.l.b16 %v400
        %v440 = vunpack.c.l.b16 %v401
        %v441 = vunpack.c.l.b16 %v402
        %v442 = vunpack.c.l.b16 %v403
        %v443 = vunpack.c.l.b16 %v404
        %v444 = vunpack.c.l.b16 %v405
        %v445 = vunpack.c.l.b16 %v406
        %v446 = vunpack.c.l.b16 %v407
        %v447 = vpack.c.b16 %v432, %v431
        %v448 = vpack.c.b16 %v434, %v433
        %v449 = vpack.c.b16 %v436, %v435
        %v450 = vpack.c.b16 %v438, %v437
        %v451 = vpack.c.b16 %v440, %v439
        %v452 = vpack.c.b16 %v442, %v441
        %v453 = vpack.c.b16 %v444, %v443
        %v454 = vpack.c.b16 %v446, %v445
        %463 = vmatprep.subr.bf16.mxu0 0
        %464 = vmatpush1.bf16.msra.mxu0 %v447
        %465 = vmatprep.subr.bf16.mxu0 0
        %466 = vmatpush1.bf16.msra.mxu0 %v448
        %467 = vmatprep.subr.bf16.mxu0 0
        %468 = vmatpush1.bf16.msra.mxu0 %v449
        %469 = vmatprep.subr.bf16.mxu0 0
        %470 = vmatpush1.bf16.msra.mxu0 %v450
        %471 = vmatprep.subr.bf16.mxu0 0
        %472 = vmatpush1.bf16.msra.mxu0 %v451
        %473 = vmatprep.subr.bf16.mxu0 0
        %474 = vmatpush1.bf16.msra.mxu0 %v452
        %475 = vmatprep.subr.bf16.mxu0 0
        %476 = vmatpush1.bf16.msra.mxu0 %v453
        %477 = vmatprep.subr.bf16.mxu0 0
        %478 = vmatpush1.bf16.msra.mxu0 %v454
        %479 = vmatprep.subr.bf16.mxu0 0
        %480 = vmatpush1.bf16.msra.mxu0 0
        %481 = vmatprep.subr.bf16.mxu0 0
        %482 = vmatpush1.bf16.msra.mxu0 0
        %483 = vmatprep.subr.bf16.mxu0 0
        %484 = vmatpush1.bf16.msra.mxu0 0
        %485 = vmatprep.subr.bf16.mxu0 0
        %486 = vmatpush1.bf16.msra.mxu0 0
        %487 = vmatprep.subr.bf16.mxu0 0
        %488 = vmatpush1.bf16.msra.mxu0 0
        %489 = vmatprep.subr.bf16.mxu0 0
        %490 = vmatpush1.bf16.msra.mxu0 0
        %491 = vmatprep.subr.bf16.mxu0 0
        %492 = vmatpush1.bf16.msra.mxu0 0
        %493 = vmatprep.subr.bf16.mxu0 0
        %494 = vmatpush1.bf16.msra.mxu0 0
        %495 = vmatprep.mubr.bf16.mxu0 0
        %496 = vmatmul.mubr.bf16.gmra.mrb[0].mxu0 %v376
        %v497 = vpop.f32.mrb[0].mxu0
        %v498 = vadd.f32 %v413, %v497
        %v499 = vpop.f32.mrb[0].mxu0
        %v500 = vpop.f32.mrb[0].mxu0
        %v501 = vadd.f32 %v413, %v500
        %v502 = vpop.f32.mrb[0].mxu0
        %503 = vmatprep.mubr.bf16.mxu0 0
        %504 = vmatmul.mubr.bf16.gmra.mrb[0].mxu0 %v377
        %v505 = vpop.f32.mrb[0].mxu0
        %v506 = vadd.f32 %v413, %v505
        %v507 = vpop.f32.mrb[0].mxu0
        %v508 = vpop.f32.mrb[0].mxu0
        %v509 = vadd.f32 %v413, %v508
        %v510 = vpop.f32.mrb[0].mxu0
        %511 = vmatprep.mubr.bf16.mxu0 0
        %512 = vmatmul.mubr.bf16.gmra.mrb[0].mxu0 %v378
        %v513 = vpop.f32.mrb[0].mxu0
        %v514 = vadd.f32 %v413, %v513
        %v515 = vpop.f32.mrb[0].mxu0
        %v516 = vpop.f32.mrb[0].mxu0
        %v517 = vadd.f32 %v413, %v516
        %v518 = vpop.f32.mrb[0].mxu0
        %519 = vmatprep.mubr.bf16.mxu0 0
        %520 = vmatmul.mubr.bf16.gmra.mrb[0].mxu0 %v379
        %v521 = vpop.f32.mrb[0].mxu0
        %v522 = vadd.f32 %v413, %v521
        %v523 = vpop.f32.mrb[0].mxu0
        %v524 = vpop.f32.mrb[0].mxu0
        %v525 = vadd.f32 %v413, %v524
        %v526 = vpop.f32.mrb[0].mxu0
        %527 = vmatprep.mubr.bf16.mxu0 0
        %528 = vmatmul.mubr.bf16.gmra.mrb[0].mxu0 %v380
        %v529 = vpop.f32.mrb[0].mxu0
        %v530 = vadd.f32 %v413, %v529
        %v531 = vpop.f32.mrb[0].mxu0
        %v532 = vpop.f32.mrb[0].mxu0
        %v533 = vadd.f32 %v413, %v532
        %v534 = vpop.f32.mrb[0].mxu0
        %535 = vmatprep.mubr.bf16.mxu0 0
        %536 = vmatmul.mubr.bf16.gmra.mrb[0].mxu0 %v381
        %v537 = vpop.f32.mrb[0].mxu0
        %v538 = vadd.f32 %v413, %v537
        %v539 = vpop.f32.mrb[0].mxu0
        %v540 = vpop.f32.mrb[0].mxu0
        %v541 = vadd.f32 %v413, %v540
        %v542 = vpop.f32.mrb[0].mxu0
        %543 = vmatprep.mubr.bf16.mxu0 0
        %544 = vmatmul.mubr.bf16.gmra.mrb[0].mxu0 %v382
        %v545 = vpop.f32.mrb[0].mxu0
        %v546 = vadd.f32 %v413, %v545
        %v547 = vpop.f32.mrb[0].mxu0
        %v548 = vpop.f32.mrb[0].mxu0
        %v549 = vadd.f32 %v413, %v548
        %v550 = vpop.f32.mrb[0].mxu0
        %551 = vmatprep.mubr.bf16.mxu0 0
        %552 = vmatmul.mubr.bf16.gmra.mrb[0].mxu0 %v383
        %v553 = vpop.f32.mrb[0].mxu0
        %v554 = vadd.f32 %v413, %v553
        %v555 = vpop.f32.mrb[0].mxu0
        %v556 = vpop.f32.mrb[0].mxu0
        %v557 = vadd.f32 %v413, %v556
        %v558 = vpop.f32.mrb[0].mxu0
        %559 = vmatprep.mubr.bf16.mxu0 0
        %560 = vmatmul.mubr.bf16.gmra.mrb[0].mxu0 %v384
        %v561 = vpop.f32.mrb[0].mxu0
        %v562 = vadd.f32 %v413, %v561
        %v563 = vpop.f32.mrb[0].mxu0
        %v564 = vpop.f32.mrb[0].mxu0
        %v565 = vadd.f32 %v413, %v564
        %v566 = vpop.f32.mrb[0].mxu0
        %567 = vmatprep.mubr.bf16.mxu0 0
        %568 = vmatmul.mubr.bf16.gmra.mrb[0].mxu0 %v385
        %v569 = vpop.f32.mrb[0].mxu0
        %v570 = vadd.f32 %v413, %v569
        %v571 = vpop.f32.mrb[0].mxu0
        %v572 = vpop.f32.mrb[0].mxu0
        %v573 = vadd.f32 %v413, %v572
        %v574 = vpop.f32.mrb[0].mxu0
        %575 = vmatprep.mubr.bf16.mxu0 0
        %576 = vmatmul.mubr.bf16.gmra.mrb[0].mxu0 %v386
        %v577 = vpop.f32.mrb[0].mxu0
        %v578 = vadd.f32 %v413, %v577
        %v579 = vpop.f32.mrb[0].mxu0
        %v580 = vpop.f32.mrb[0].mxu0
        %v581 = vadd.f32 %v413, %v580
        %v582 = vpop.f32.mrb[0].mxu0
        %583 = vmatprep.mubr.bf16.mxu0 0
        %584 = vmatmul.mubr.bf16.gmra.mrb[0].mxu0 %v387
        %v585 = vpop.f32.mrb[0].mxu0
        %v586 = vadd.f32 %v413, %v585
        %v587 = vpop.f32.mrb[0].mxu0
        %v588 = vpop.f32.mrb[0].mxu0
        %v589 = vadd.f32 %v413, %v588
        %v590 = vpop.f32.mrb[0].mxu0
        %591 = vmatprep.mubr.bf16.mxu0 0
        %592 = vmatmul.mubr.bf16.gmra.mrb[0].mxu0 %v388
        %v593 = vpop.f32.mrb[0].mxu0
        %v594 = vadd.f32 %v413, %v593
        %v595 = vpop.f32.mrb[0].mxu0
        %v596 = vpop.f32.mrb[0].mxu0
        %v597 = vadd.f32 %v413, %v596
        %v598 = vpop.f32.mrb[0].mxu0
        %599 = vmatprep.mubr.bf16.mxu0 0
        %600 = vmatmul.mubr.bf16.gmra.mrb[0].mxu0 %v389
        %v601 = vpop.f32.mrb[0].mxu0
        %v602 = vadd.f32 %v413, %v601
        %v603 = vpop.f32.mrb[0].mxu0
        %v604 = vpop.f32.mrb[0].mxu0
        %v605 = vadd.f32 %v413, %v604
        %v606 = vpop.f32.mrb[0].mxu0
        %607 = vmatprep.mubr.bf16.mxu0 0
        %608 = vmatmul.mubr.bf16.gmra.mrb[0].mxu0 %v390
        %v609 = vpop.f32.mrb[0].mxu0
        %v610 = vadd.f32 %v413, %v609
        %v611 = vpop.f32.mrb[0].mxu0
        %v612 = vpop.f32.mrb[0].mxu0
        %v613 = vadd.f32 %v413, %v612
        %v614 = vpop.f32.mrb[0].mxu0
        %615 = vmatprep.mubr.bf16.mxu0 0
        %616 = vmatmul.mubr.bf16.gmra.mrb[0].mxu0 %v391
        %v617 = vpop.f32.mrb[0].mxu0
        %v618 = vadd.f32 %v413, %v617
        %v619 = vpop.f32.mrb[0].mxu0
        %v620 = vpop.f32.mrb[0].mxu0
        %v621 = vadd.f32 %v413, %v620
        %v622 = vpop.f32.mrb[0].mxu0
        %623 = vdwg.mxu0
        %v624 = vmax.f32 %v498, 0.0
        %v625 = vmax.f32 %v501, 0.0
        %v626 = vmax.f32 %v506, 0.0
        %v627 = vmax.f32 %v509, 0.0
        %v628 = vmax.f32 %v514, 0.0
        %v629 = vmax.f32 %v517, 0.0
        %v630 = vmax.f32 %v522, 0.0
        %v631 = vmax.f32 %v525, 0.0
        %v632 = vmax.f32 %v530, 0.0
        %v633 = vmax.f32 %v533, 0.0
        %v634 = vmax.f32 %v538, 0.0
        %v635 = vmax.f32 %v541, 0.0
        %v636 = vmax.f32 %v546, 0.0
        %v637 = vmax.f32 %v549, 0.0
        %v638 = vmax.f32 %v554, 0.0
        %v639 = vmax.f32 %v557, 0.0
        %v640 = vmax.f32 %v562, 0.0
        %v641 = vmax.f32 %v565, 0.0
        %v642 = vmax.f32 %v570, 0.0
        %v643 = vmax.f32 %v573, 0.0
        %v644 = vmax.f32 %v578, 0.0
        %v645 = vmax.f32 %v581, 0.0
        %v646 = vmax.f32 %v586, 0.0
        %v647 = vmax.f32 %v589, 0.0
        %v648 = vmax.f32 %v594, 0.0
        %v649 = vmax.f32 %v597, 0.0
        %v650 = vmax.f32 %v602, 0.0
        %v651 = vmax.f32 %v605, 0.0
        %v652 = vmax.f32 %v610, 0.0
        %v653 = vmax.f32 %v613, 0.0
        %v654 = vmax.f32 %v618, 0.0
        %v655 = vmax.f32 %v621, 0.0
        %v656 = vadd.f32 %v344, %v624
        %v657 = vadd.f32 %v345, %v625
        %v658 = vadd.f32 %v346, %v626
        %v659 = vadd.f32 %v347, %v627
        %v660 = vadd.f32 %v348, %v628
        %v661 = vadd.f32 %v349, %v629
        %v662 = vadd.f32 %v350, %v630
        %v663 = vadd.f32 %v351, %v631
        %v664 = vadd.f32 %v352, %v632
        %v665 = vadd.f32 %v353, %v633
        %v666 = vadd.f32 %v354, %v634
        %v667 = vadd.f32 %v355, %v635
        %v668 = vadd.f32 %v356, %v636
        %v669 = vadd.f32 %v357, %v637
        %v670 = vadd.f32 %v358, %v638
        %v671 = vadd.f32 %v359, %v639
        %v672 = vadd.f32 %v360, %v640
        %v673 = vadd.f32 %v361, %v641
        %v674 = vadd.f32 %v362, %v642
        %v675 = vadd.f32 %v363, %v643
        %v676 = vadd.f32 %v364, %v644
        %v677 = vadd.f32 %v365, %v645
        %v678 = vadd.f32 %v366, %v646
        %v679 = vadd.f32 %v367, %v647
        %v680 = vadd.f32 %v368, %v648
        %v681 = vadd.f32 %v369, %v649
        %v682 = vadd.f32 %v370, %v650
        %v683 = vadd.f32 %v371, %v651
        %v684 = vadd.f32 %v372, %v652
        %v685 = vadd.f32 %v373, %v653
        %v686 = vadd.f32 %v374, %v654
        %v687 = vadd.f32 %v375, %v655
        %v688 = vpack.c.bf16 %v657, %v656
        %v689 = vpack.c.bf16 %v659, %v658
        %v690 = vpack.c.bf16 %v661, %v660
        %v691 = vpack.c.bf16 %v663, %v662
        %v692 = vpack.c.bf16 %v665, %v664
        %v693 = vpack.c.bf16 %v667, %v666
        %v694 = vpack.c.bf16 %v669, %v668
        %v695 = vpack.c.bf16 %v671, %v670
        %v696 = vpack.c.bf16 %v673, %v672
        %v697 = vpack.c.bf16 %v675, %v674
        %v698 = vpack.c.bf16 %v677, %v676
        %v699 = vpack.c.bf16 %v679, %v678
        %v700 = vpack.c.bf16 %v681, %v680
        %v701 = vpack.c.bf16 %v683, %v682
        %v702 = vpack.c.bf16 %v685, %v684
        %v703 = vpack.c.bf16 %v687, %v686
        %v704 = vld [vmem:[#allocation7] sm:$0xff]
        %v705 = vld [vmem:[#allocation7 + $0x8] sm:$0xff]
        %v706 = vld [vmem:[#allocation7 + $0x10] sm:$0xff]
        %v707 = vld [vmem:[#allocation7 + $0x18] sm:$0xff]
        %v708 = vld [vmem:[#allocation7 + $0x20] sm:$0xff]
        %v709 = vld [vmem:[#allocation7 + $0x28] sm:$0xff]
        %v710 = vld [vmem:[#allocation7 + $0x30] sm:$0xff]
        %v711 = vld [vmem:[#allocation7 + $0x38] sm:$0xff]
        %v712 = vld [vmem:[#allocation7 + $0x40] sm:$0xff]
        %v713 = vld [vmem:[#allocation7 + $0x48] sm:$0xff]
        %v714 = vld [vmem:[#allocation7 + $0x50] sm:$0xff]
        %v715 = vld [vmem:[#allocation7 + $0x58] sm:$0xff]
        %v716 = vld [vmem:[#allocation7 + $0x60] sm:$0xff]
        %v717 = vld [vmem:[#allocation7 + $0x68] sm:$0xff]
        %v718 = vld [vmem:[#allocation7 + $0x70] sm:$0xff]
        %v719 = vld [vmem:[#allocation7 + $0x78] sm:$0xff]
        %v720 = vld [vmem:[#allocation7 + $0x80] sm:$0xff]
        %v721 = vld [vmem:[#allocation7 + $0x88] sm:$0xff]
        %v722 = vld [vmem:[#allocation7 + $0x90] sm:$0xff]
        %v723 = vld [vmem:[#allocation7 + $0x98] sm:$0xff]
        %v724 = vld [vmem:[#allocation7 + $0xa0] sm:$0xff]
        %v725 = vld [vmem:[#allocation7 + $0xa8] sm:$0xff]
        %v726 = vld [vmem:[#allocation7 + $0xb0] sm:$0xff]
        %v727 = vld [vmem:[#allocation7 + $0xb8] sm:$0xff]
        %v728 = vld [vmem:[#allocation7 + $0xc0] sm:$0xff]
        %v729 = vld [vmem:[#allocation7 + $0xc8] sm:$0xff]
        %v730 = vld [vmem:[#allocation7 + $0xd0] sm:$0xff]
        %v731 = vld [vmem:[#allocation7 + $0xd8] sm:$0xff]
        %v732 = vld [vmem:[#allocation7 + $0xe0] sm:$0xff]
        %v733 = vld [vmem:[#allocation7 + $0xe8] sm:$0xff]
        %v734 = vld [vmem:[#allocation7 + $0xf0] sm:$0xff]
        %v735 = vld [vmem:[#allocation7 + $0xf8] sm:$0xff]
        %v736 = vld [vmem:[%s4] sm:$0xf]
        %v738 = vlaneseq
        %v739 = vshrl.u32 %v738, 7
        %v740 = vsub.s32 0, %v739
        %v741 = vrot.slane %v736, %v740
        %v742 = vlaneseq
        %v743 = vshrl.u32 %v742, 7
        %v744 = vsub.s32 1, %v743
        %v745 = vrot.slane %v736, %v744
        %v746 = vlaneseq
        %v747 = vshrl.u32 %v746, 7
        %v748 = vsub.s32 2, %v747
        %v749 = vrot.slane %v736, %v748
        %v750 = vlaneseq
        %v751 = vshrl.u32 %v750, 7
        %v752 = vsub.s32 3, %v751
        %v753 = vrot.slane %v736, %v752
        %v790 = vunpack.c.l.b16 %v704
        %v791 = vunpack.c.h.b16 %v704
        %v792 = vunpack.c.l.b16 %v705
        %v793 = vunpack.c.h.b16 %v705
        %v794 = vunpack.c.l.b16 %v706
        %v795 = vunpack.c.h.b16 %v706
        %v796 = vunpack.c.l.b16 %v707
        %v797 = vunpack.c.h.b16 %v707
        %v798 = vunpack.c.l.b16 %v708
        %v799 = vunpack.c.h.b16 %v708
        %v800 = vunpack.c.l.b16 %v709
        %v801 = vunpack.c.h.b16 %v709
        %v802 = vunpack.c.l.b16 %v710
        %v803 = vunpack.c.h.b16 %v710
        %v804 = vunpack.c.l.b16 %v711
        %v805 = vunpack.c.h.b16 %v711
        %v806 = vunpack.c.l.b16 %v712
        %v807 = vunpack.c.h.b16 %v712
        %v808 = vunpack.c.l.b16 %v713
        %v809 = vunpack.c.h.b16 %v713
        %v810 = vunpack.c.l.b16 %v714
        %v811 = vunpack.c.h.b16 %v714
        %v812 = vunpack.c.l.b16 %v715
        %v813 = vunpack.c.h.b16 %v715
        %v814 = vunpack.c.l.b16 %v716
        %v815 = vunpack.c.h.b16 %v716
        %v816 = vunpack.c.l.b16 %v717
        %v817 = vunpack.c.h.b16 %v717
        %v818 = vunpack.c.l.b16 %v718
        %v819 = vunpack.c.h.b16 %v718
        %v820 = vunpack.c.l.b16 %v719
        %v821 = vunpack.c.h.b16 %v719
        %v822 = vunpack.c.l.b16 %v720
        %v823 = vunpack.c.h.b16 %v720
        %v824 = vunpack.c.l.b16 %v721
        %v825 = vunpack.c.h.b16 %v721
        %v826 = vunpack.c.l.b16 %v722
        %v827 = vunpack.c.h.b16 %v722
        %v828 = vunpack.c.l.b16 %v723
        %v829 = vunpack.c.h.b16 %v723
        %v830 = vunpack.c.l.b16 %v724
        %v831 = vunpack.c.h.b16 %v724
        %v832 = vunpack.c.l.b16 %v725
        %v833 = vunpack.c.h.b16 %v725
        %v834 = vunpack.c.l.b16 %v726
        %v835 = vunpack.c.h.b16 %v726
        %v836 = vunpack.c.l.b16 %v727
        %v837 = vunpack.c.h.b16 %v727
        %v838 = vunpack.c.l.b16 %v728
        %v839 = vunpack.c.h.b16 %v728
        %v840 = vunpack.c.l.b16 %v729
        %v841 = vunpack.c.h.b16 %v729
        %v842 = vunpack.c.l.b16 %v730
        %v843 = vunpack.c.h.b16 %v730
        %v844 = vunpack.c.l.b16 %v731
        %v845 = vunpack.c.h.b16 %v731
        %v846 = vunpack.c.l.b16 %v732
        %v847 = vunpack.c.h.b16 %v732
        %v848 = vunpack.c.l.b16 %v733
        %v849 = vunpack.c.h.b16 %v733
        %v850 = vunpack.c.l.b16 %v734
        %v851 = vunpack.c.h.b16 %v734
        %v852 = vunpack.c.l.b16 %v735
        %v853 = vunpack.c.h.b16 %v735
        %v854 = vpack.c.b16 %v794, %v790
        %v855 = vpack.c.b16 %v795, %v791
        %v856 = vpack.c.b16 %v796, %v792
        %v857 = vpack.c.b16 %v797, %v793
        %v858 = vpack.c.b16 %v802, %v798
        %v859 = vpack.c.b16 %v803, %v799
        %v860 = vpack.c.b16 %v804, %v800
        %v861 = vpack.c.b16 %v805, %v801
        %v862 = vpack.c.b16 %v810, %v806
        %v863 = vpack.c.b16 %v811, %v807
        %v864 = vpack.c.b16 %v812, %v808
        %v865 = vpack.c.b16 %v813, %v809
        %v866 = vpack.c.b16 %v818, %v814
        %v867 = vpack.c.b16 %v819, %v815
        %v868 = vpack.c.b16 %v820, %v816
        %v869 = vpack.c.b16 %v821, %v817
        %v870 = vpack.c.b16 %v826, %v822
        %v871 = vpack.c.b16 %v827, %v823
        %v872 = vpack.c.b16 %v828, %v824
        %v873 = vpack.c.b16 %v829, %v825
        %v874 = vpack.c.b16 %v834, %v830
        %v875 = vpack.c.b16 %v835, %v831
        %v876 = vpack.c.b16 %v836, %v832
        %v877 = vpack.c.b16 %v837, %v833
        %v878 = vpack.c.b16 %v842, %v838
        %v879 = vpack.c.b16 %v843, %v839
        %v880 = vpack.c.b16 %v844, %v840
        %v881 = vpack.c.b16 %v845, %v841
        %v882 = vpack.c.b16 %v850, %v846
        %v883 = vpack.c.b16 %v851, %v847
        %v884 = vpack.c.b16 %v852, %v848
        %v885 = vpack.c.b16 %v853, %v849
        %918 = vmatprep.subr.bf16.mxu0 %v855
        %919 = vmatpush1.bf16.msra.mxu0 %v854
        %920 = vmatprep.subr.bf16.mxu0 %v859
        %921 = vmatpush1.bf16.msra.mxu0 %v858
        %922 = vmatprep.subr.bf16.mxu0 %v863
        %923 = vmatpush1.bf16.msra.mxu0 %v862
        %924 = vmatprep.subr.bf16.mxu0 %v867
        %925 = vmatpush1.bf16.msra.mxu0 %v866
        %926 = vmatprep.subr.bf16.mxu0 %v871
        %927 = vmatpush1.bf16.msra.mxu0 %v870
        %928 = vmatprep.subr.bf16.mxu0 %v875
        %929 = vmatpush1.bf16.msra.mxu0 %v874
        %930 = vmatprep.subr.bf16.mxu0 %v879
        %931 = vmatpush1.bf16.msra.mxu0 %v878
        %932 = vmatprep.subr.bf16.mxu0 %v883
        %933 = vmatpush1.bf16.msra.mxu0 %v882
        %934 = vmatprep.subr.bf16.mxu0 0
        %935 = vmatpush1.bf16.msra.mxu0 0
        %936 = vmatprep.subr.bf16.mxu0 0
        %937 = vmatpush1.bf16.msra.mxu0 0
        %938 = vmatprep.subr.bf16.mxu0 0
        %939 = vmatpush1.bf16.msra.mxu0 0
        %940 = vmatprep.subr.bf16.mxu0 0
        %941 = vmatpush1.bf16.msra.mxu0 0
        %942 = vmatprep.subr.bf16.mxu0 0
        %943 = vmatpush1.bf16.msra.mxu0 0
        %944 = vmatprep.subr.bf16.mxu0 0
        %945 = vmatpush1.bf16.msra.mxu0 0
        %946 = vmatprep.subr.bf16.mxu0 0
        %947 = vmatpush1.bf16.msra.mxu0 0
        %948 = vmatprep.subr.bf16.mxu0 0
        %949 = vmatpush1.bf16.msra.mxu0 0
        %950 = vmatprep.mubr.bf16.mxu0 0
        %951 = vmatmul.mubr.bf16.gmra.mrb[0].mxu0 %v688
        %v952 = vpop.f32.mrb[0].mxu0
        %v953 = vadd.f32 %v741, %v952
        %v954 = vpop.f32.mrb[0].mxu0
        %v955 = vadd.f32 %v745, %v954
        %v956 = vpop.f32.mrb[0].mxu0
        %v957 = vadd.f32 %v741, %v956
        %v958 = vpop.f32.mrb[0].mxu0
        %v959 = vadd.f32 %v745, %v958
        %960 = vmatprep.mubr.bf16.mxu0 0
        %961 = vmatmul.mubr.bf16.gmra.mrb[0].mxu0 %v689
        %v962 = vpop.f32.mrb[0].mxu0
        %v963 = vadd.f32 %v741, %v962
        %v964 = vpop.f32.mrb[0].mxu0
        %v965 = vadd.f32 %v745, %v964
        %v966 = vpop.f32.mrb[0].mxu0
        %v967 = vadd.f32 %v741, %v966
        %v968 = vpop.f32.mrb[0].mxu0
        %v969 = vadd.f32 %v745, %v968
        %970 = vmatprep.mubr.bf16.mxu0 0
        %971 = vmatmul.mubr.bf16.gmra.mrb[0].mxu0 %v690
        %v972 = vpop.f32.mrb[0].mxu0
        %v973 = vadd.f32 %v741, %v972
        %v974 = vpop.f32.mrb[0].mxu0
        %v975 = vadd.f32 %v745, %v974
        %v976 = vpop.f32.mrb[0].mxu0
        %v977 = vadd.f32 %v741, %v976
        %v978 = vpop.f32.mrb[0].mxu0
        %v979 = vadd.f32 %v745, %v978
        %980 = vmatprep.mubr.bf16.mxu0 0
        %981 = vmatmul.mubr.bf16.gmra.mrb[0].mxu0 %v691
        %v982 = vpop.f32.mrb[0].mxu0
        %v983 = vadd.f32 %v741, %v982
        %v984 = vpop.f32.mrb[0].mxu0
        %v985 = vadd.f32 %v745, %v984
        %v986 = vpop.f32.mrb[0].mxu0
        %v987 = vadd.f32 %v741, %v986
        %v988 = vpop.f32.mrb[0].mxu0
        %v989 = vadd.f32 %v745, %v988
        %990 = vmatprep.mubr.bf16.mxu0 0
        %991 = vmatmul.mubr.bf16.gmra.mrb[0].mxu0 %v692
        %v992 = vpop.f32.mrb[0].mxu0
        %v993 = vadd.f32 %v741, %v992
        %v994 = vpop.f32.mrb[0].mxu0
        %v995 = vadd.f32 %v745, %v994
        %v996 = vpop.f32.mrb[0].mxu0
        %v997 = vadd.f32 %v741, %v996
        %v998 = vpop.f32.mrb[0].mxu0
        %v999 = vadd.f32 %v745, %v998
        %1000 = vmatprep.mubr.bf16.mxu0 0
        %1001 = vmatmul.mubr.bf16.gmra.mrb[0].mxu0 %v693
        %v1002 = vpop.f32.mrb[0].mxu0
        %v1003 = vadd.f32 %v741, %v1002
        %v1004 = vpop.f32.mrb[0].mxu0
        %v1005 = vadd.f32 %v745, %v1004
        %v1006 = vpop.f32.mrb[0].mxu0
        %v1007 = vadd.f32 %v741, %v1006
        %v1008 = vpop.f32.mrb[0].mxu0
        %v1009 = vadd.f32 %v745, %v1008
        %1010 = vmatprep.mubr.bf16.mxu0 0
        %1011 = vmatmul.mubr.bf16.gmra.mrb[0].mxu0 %v694
        %v1012 = vpop.f32.mrb[0].mxu0
        %v1013 = vadd.f32 %v741, %v1012
        %v1014 = vpop.f32.mrb[0].mxu0
        %v1015 = vadd.f32 %v745, %v1014
        %v1016 = vpop.f32.mrb[0].mxu0
        %v1017 = vadd.f32 %v741, %v1016
        %v1018 = vpop.f32.mrb[0].mxu0
        %v1019 = vadd.f32 %v745, %v1018
        %1020 = vmatprep.mubr.bf16.mxu0 0
        %1021 = vmatmul.mubr.bf16.gmra.mrb[0].mxu0 %v695
        %v1022 = vpop.f32.mrb[0].mxu0
        %v1023 = vadd.f32 %v741, %v1022
        %v1024 = vpop.f32.mrb[0].mxu0
        %v1025 = vadd.f32 %v745, %v1024
        %v1026 = vpop.f32.mrb[0].mxu0
        %v1027 = vadd.f32 %v741, %v1026
        %v1028 = vpop.f32.mrb[0].mxu0
        %v1029 = vadd.f32 %v745, %v1028
        %1030 = vmatprep.mubr.bf16.mxu0 0
        %1031 = vmatmul.mubr.bf16.gmra.mrb[0].mxu0 %v696
        %v1032 = vpop.f32.mrb[0].mxu0
        %v1033 = vadd.f32 %v741, %v1032
        %v1034 = vpop.f32.mrb[0].mxu0
        %v1035 = vadd.f32 %v745, %v1034
        %v1036 = vpop.f32.mrb[0].mxu0
        %v1037 = vadd.f32 %v741, %v1036
        %v1038 = vpop.f32.mrb[0].mxu0
        %v1039 = vadd.f32 %v745, %v1038
        %1040 = vmatprep.mubr.bf16.mxu0 0
        %1041 = vmatmul.mubr.bf16.gmra.mrb[0].mxu0 %v697
        %v1042 = vpop.f32.mrb[0].mxu0
        %v1043 = vadd.f32 %v741, %v1042
        %v1044 = vpop.f32.mrb[0].mxu0
        %v1045 = vadd.f32 %v745, %v1044
        %v1046 = vpop.f32.mrb[0].mxu0
        %v1047 = vadd.f32 %v741, %v1046
        %v1048 = vpop.f32.mrb[0].mxu0
        %v1049 = vadd.f32 %v745, %v1048
        %1050 = vmatprep.mubr.bf16.mxu0 0
        %1051 = vmatmul.mubr.bf16.gmra.mrb[0].mxu0 %v698
        %v1052 = vpop.f32.mrb[0].mxu0
        %v1053 = vadd.f32 %v741, %v1052
        %v1054 = vpop.f32.mrb[0].mxu0
        %v1055 = vadd.f32 %v745, %v1054
        %v1056 = vpop.f32.mrb[0].mxu0
        %v1057 = vadd.f32 %v741, %v1056
        %v1058 = vpop.f32.mrb[0].mxu0
        %v1059 = vadd.f32 %v745, %v1058
        %1060 = vmatprep.mubr.bf16.mxu0 0
        %1061 = vmatmul.mubr.bf16.gmra.mrb[0].mxu0 %v699
        %v1062 = vpop.f32.mrb[0].mxu0
        %v1063 = vadd.f32 %v741, %v1062
        %v1064 = vpop.f32.mrb[0].mxu0
        %v1065 = vadd.f32 %v745, %v1064
        %v1066 = vpop.f32.mrb[0].mxu0
        %v1067 = vadd.f32 %v741, %v1066
        %v1068 = vpop.f32.mrb[0].mxu0
        %v1069 = vadd.f32 %v745, %v1068
        %1070 = vmatprep.mubr.bf16.mxu0 0
        %1071 = vmatmul.mubr.bf16.gmra.mrb[0].mxu0 %v700
        %v1072 = vpop.f32.mrb[0].mxu0
        %v1073 = vadd.f32 %v741, %v1072
        %v1074 = vpop.f32.mrb[0].mxu0
        %v1075 = vadd.f32 %v745, %v1074
        %v1076 = vpop.f32.mrb[0].mxu0
        %v1077 = vadd.f32 %v741, %v1076
        %v1078 = vpop.f32.mrb[0].mxu0
        %v1079 = vadd.f32 %v745, %v1078
        %1080 = vmatprep.mubr.bf16.mxu0 0
        %1081 = vmatmul.mubr.bf16.gmra.mrb[0].mxu0 %v701
        %v1082 = vpop.f32.mrb[0].mxu0
        %v1083 = vadd.f32 %v741, %v1082
        %v1084 = vpop.f32.mrb[0].mxu0
        %v1085 = vadd.f32 %v745, %v1084
        %v1086 = vpop.f32.mrb[0].mxu0
        %v1087 = vadd.f32 %v741, %v1086
        %v1088 = vpop.f32.mrb[0].mxu0
        %v1089 = vadd.f32 %v745, %v1088
        %1090 = vmatprep.mubr.bf16.mxu0 0
        %1091 = vmatmul.mubr.bf16.gmra.mrb[0].mxu0 %v702
        %v1092 = vpop.f32.mrb[0].mxu0
        %v1093 = vadd.f32 %v741, %v1092
        %v1094 = vpop.f32.mrb[0].mxu0
        %v1095 = vadd.f32 %v745, %v1094
        %v1096 = vpop.f32.mrb[0].mxu0
        %v1097 = vadd.f32 %v741, %v1096
        %v1098 = vpop.f32.mrb[0].mxu0
        %v1099 = vadd.f32 %v745, %v1098
        %1100 = vmatprep.mubr.bf16.mxu0 0
        %1101 = vmatmul.mubr.bf16.gmra.mrb[0].mxu0 %v703
        %v1102 = vpop.f32.mrb[0].mxu0
        %v1103 = vadd.f32 %v741, %v1102
        %v1104 = vpop.f32.mrb[0].mxu0
        %v1105 = vadd.f32 %v745, %v1104
        %v1106 = vpop.f32.mrb[0].mxu0
        %v1107 = vadd.f32 %v741, %v1106
        %v1108 = vpop.f32.mrb[0].mxu0
        %v1109 = vadd.f32 %v745, %v1108
        %1110 = vdwg.mxu0
        %1111 = vmatprep.subr.bf16.mxu0 %v857
        %1112 = vmatpush1.bf16.msra.mxu0 %v856
        %1113 = vmatprep.subr.bf16.mxu0 %v861
        %1114 = vmatpush1.bf16.msra.mxu0 %v860
        %1115 = vmatprep.subr.bf16.mxu0 %v865
        %1116 = vmatpush1.bf16.msra.mxu0 %v864
        %1117 = vmatprep.subr.bf16.mxu0 %v869
        %1118 = vmatpush1.bf16.msra.mxu0 %v868
        %1119 = vmatprep.subr.bf16.mxu0 %v873
        %1120 = vmatpush1.bf16.msra.mxu0 %v872
        %1121 = vmatprep.subr.bf16.mxu0 %v877
        %1122 = vmatpush1.bf16.msra.mxu0 %v876
        %1123 = vmatprep.subr.bf16.mxu0 %v881
        %1124 = vmatpush1.bf16.msra.mxu0 %v880
        %1125 = vmatprep.subr.bf16.mxu0 %v885
        %1126 = vmatpush1.bf16.msra.mxu0 %v884
        %1127 = vmatprep.subr.bf16.mxu0 0
        %1128 = vmatpush1.bf16.msra.mxu0 0
        %1129 = vmatprep.subr.bf16.mxu0 0
        %1130 = vmatpush1.bf16.msra.mxu0 0
        %1131 = vmatprep.subr.bf16.mxu0 0
        %1132 = vmatpush1.bf16.msra.mxu0 0
        %1133 = vmatprep.subr.bf16.mxu0 0
        %1134 = vmatpush1.bf16.msra.mxu0 0
        %1135 = vmatprep.subr.bf16.mxu0 0
        %1136 = vmatpush1.bf16.msra.mxu0 0
        %1137 = vmatprep.subr.bf16.mxu0 0
        %1138 = vmatpush1.bf16.msra.mxu0 0
        %1139 = vmatprep.subr.bf16.mxu0 0
        %1140 = vmatpush1.bf16.msra.mxu0 0
        %1141 = vmatprep.subr.bf16.mxu0 0
        %1142 = vmatpush1.bf16.msra.mxu0 0
        %1143 = vmatprep.mubr.bf16.mxu0 0
        %1144 = vmatmul.mubr.bf16.gmra.mrb[0].mxu0 %v688
        %v1145 = vpop.f32.mrb[0].mxu0
        %v1146 = vadd.f32 %v749, %v1145
        %v1147 = vpop.f32.mrb[0].mxu0
        %v1148 = vadd.f32 %v753, %v1147
        %v1149 = vpop.f32.mrb[0].mxu0
        %v1150 = vadd.f32 %v749, %v1149
        %v1151 = vpop.f32.mrb[0].mxu0
        %v1152 = vadd.f32 %v753, %v1151
        %1153 = vmatprep.mubr.bf16.mxu0 0
        %1154 = vmatmul.mubr.bf16.gmra.mrb[0].mxu0 %v689
        %v1155 = vpop.f32.mrb[0].mxu0
        %v1156 = vadd.f32 %v749, %v1155
        %v1157 = vpop.f32.mrb[0].mxu0
        %v1158 = vadd.f32 %v753, %v1157
        %v1159 = vpop.f32.mrb[0].mxu0
        %v1160 = vadd.f32 %v749, %v1159
        %v1161 = vpop.f32.mrb[0].mxu0
        %v1162 = vadd.f32 %v753, %v1161
        %1163 = vmatprep.mubr.bf16.mxu0 0
        %1164 = vmatmul.mubr.bf16.gmra.mrb[0].mxu0 %v690
        %v1165 = vpop.f32.mrb[0].mxu0
        %v1166 = vadd.f32 %v749, %v1165
        %v1167 = vpop.f32.mrb[0].mxu0
        %v1168 = vadd.f32 %v753, %v1167
        %v1169 = vpop.f32.mrb[0].mxu0
        %v1170 = vadd.f32 %v749, %v1169
        %v1171 = vpop.f32.mrb[0].mxu0
        %v1172 = vadd.f32 %v753, %v1171
        %1173 = vmatprep.mubr.bf16.mxu0 0
        %1174 = vmatmul.mubr.bf16.gmra.mrb[0].mxu0 %v691
        %v1175 = vpop.f32.mrb[0].mxu0
        %v1176 = vadd.f32 %v749, %v1175
        %v1177 = vpop.f32.mrb[0].mxu0
        %v1178 = vadd.f32 %v753, %v1177
        %v1179 = vpop.f32.mrb[0].mxu0
        %v1180 = vadd.f32 %v749, %v1179
        %v1181 = vpop.f32.mrb[0].mxu0
        %v1182 = vadd.f32 %v753, %v1181
        %1183 = vmatprep.mubr.bf16.mxu0 0
        %1184 = vmatmul.mubr.bf16.gmra.mrb[0].mxu0 %v692
        %v1185 = vpop.f32.mrb[0].mxu0
        %v1186 = vadd.f32 %v749, %v1185
        %v1187 = vpop.f32.mrb[0].mxu0
        %v1188 = vadd.f32 %v753, %v1187
        %v1189 = vpop.f32.mrb[0].mxu0
        %v1190 = vadd.f32 %v749, %v1189
        %v1191 = vpop.f32.mrb[0].mxu0
        %v1192 = vadd.f32 %v753, %v1191
        %1193 = vmatprep.mubr.bf16.mxu0 0
        %1194 = vmatmul.mubr.bf16.gmra.mrb[0].mxu0 %v693
        %v1195 = vpop.f32.mrb[0].mxu0
        %v1196 = vadd.f32 %v749, %v1195
        %v1197 = vpop.f32.mrb[0].mxu0
        %v1198 = vadd.f32 %v753, %v1197
        %v1199 = vpop.f32.mrb[0].mxu0
        %v1200 = vadd.f32 %v749, %v1199
        %v1201 = vpop.f32.mrb[0].mxu0
        %v1202 = vadd.f32 %v753, %v1201
        %1203 = vmatprep.mubr.bf16.mxu0 0
        %1204 = vmatmul.mubr.bf16.gmra.mrb[0].mxu0 %v694
        %v1205 = vpop.f32.mrb[0].mxu0
        %v1206 = vadd.f32 %v749, %v1205
        %v1207 = vpop.f32.mrb[0].mxu0
        %v1208 = vadd.f32 %v753, %v1207
        %v1209 = vpop.f32.mrb[0].mxu0
        %v1210 = vadd.f32 %v749, %v1209
        %v1211 = vpop.f32.mrb[0].mxu0
        %v1212 = vadd.f32 %v753, %v1211
        %1213 = vmatprep.mubr.bf16.mxu0 0
        %1214 = vmatmul.mubr.bf16.gmra.mrb[0].mxu0 %v695
        %v1215 = vpop.f32.mrb[0].mxu0
        %v1216 = vadd.f32 %v749, %v1215
        %v1217 = vpop.f32.mrb[0].mxu0
        %v1218 = vadd.f32 %v753, %v1217
        %v1219 = vpop.f32.mrb[0].mxu0
        %v1220 = vadd.f32 %v749, %v1219
        %v1221 = vpop.f32.mrb[0].mxu0
        %v1222 = vadd.f32 %v753, %v1221
        %1223 = vmatprep.mubr.bf16.mxu0 0
        %1224 = vmatmul.mubr.bf16.gmra.mrb[0].mxu0 %v696
        %v1225 = vpop.f32.mrb[0].mxu0
        %v1226 = vadd.f32 %v749, %v1225
        %v1227 = vpop.f32.mrb[0].mxu0
        %v1228 = vadd.f32 %v753, %v1227
        %v1229 = vpop.f32.mrb[0].mxu0
        %v1230 = vadd.f32 %v749, %v1229
        %v1231 = vpop.f32.mrb[0].mxu0
        %v1232 = vadd.f32 %v753, %v1231
        %1233 = vmatprep.mubr.bf16.mxu0 0
        %1234 = vmatmul.mubr.bf16.gmra.mrb[0].mxu0 %v697
        %v1235 = vpop.f32.mrb[0].mxu0
        %v1236 = vadd.f32 %v749, %v1235
        %v1237 = vpop.f32.mrb[0].mxu0
        %v1238 = vadd.f32 %v753, %v1237
        %v1239 = vpop.f32.mrb[0].mxu0
        %v1240 = vadd.f32 %v749, %v1239
        %v1241 = vpop.f32.mrb[0].mxu0
        %v1242 = vadd.f32 %v753, %v1241
        %1243 = vmatprep.mubr.bf16.mxu0 0
        %1244 = vmatmul.mubr.bf16.gmra.mrb[0].mxu0 %v698
        %v1245 = vpop.f32.mrb[0].mxu0
        %v1246 = vadd.f32 %v749, %v1245
        %v1247 = vpop.f32.mrb[0].mxu0
        %v1248 = vadd.f32 %v753, %v1247
        %v1249 = vpop.f32.mrb[0].mxu0
        %v1250 = vadd.f32 %v749, %v1249
        %v1251 = vpop.f32.mrb[0].mxu0
        %v1252 = vadd.f32 %v753, %v1251
        %1253 = vmatprep.mubr.bf16.mxu0 0
        %1254 = vmatmul.mubr.bf16.gmra.mrb[0].mxu0 %v699
        %v1255 = vpop.f32.mrb[0].mxu0
        %v1256 = vadd.f32 %v749, %v1255
        %v1257 = vpop.f32.mrb[0].mxu0
        %v1258 = vadd.f32 %v753, %v1257
        %v1259 = vpop.f32.mrb[0].mxu0
        %v1260 = vadd.f32 %v749, %v1259
        %v1261 = vpop.f32.mrb[0].mxu0
        %v1262 = vadd.f32 %v753, %v1261
        %1263 = vmatprep.mubr.bf16.mxu0 0
        %1264 = vmatmul.mubr.bf16.gmra.mrb[0].mxu0 %v700
        %v1265 = vpop.f32.mrb[0].mxu0
        %v1266 = vadd.f32 %v749, %v1265
        %v1267 = vpop.f32.mrb[0].mxu0
        %v1268 = vadd.f32 %v753, %v1267
        %v1269 = vpop.f32.mrb[0].mxu0
        %v1270 = vadd.f32 %v749, %v1269
        %v1271 = vpop.f32.mrb[0].mxu0
        %v1272 = vadd.f32 %v753, %v1271
        %1273 = vmatprep.mubr.bf16.mxu0 0
        %1274 = vmatmul.mubr.bf16.gmra.mrb[0].mxu0 %v701
        %v1275 = vpop.f32.mrb[0].mxu0
        %v1276 = vadd.f32 %v749, %v1275
        %v1277 = vpop.f32.mrb[0].mxu0
        %v1278 = vadd.f32 %v753, %v1277
        %v1279 = vpop.f32.mrb[0].mxu0
        %v1280 = vadd.f32 %v749, %v1279
        %v1281 = vpop.f32.mrb[0].mxu0
        %v1282 = vadd.f32 %v753, %v1281
        %1283 = vmatprep.mubr.bf16.mxu0 0
        %1284 = vmatmul.mubr.bf16.gmra.mrb[0].mxu0 %v702
        %v1285 = vpop.f32.mrb[0].mxu0
        %v1286 = vadd.f32 %v749, %v1285
        %v1287 = vpop.f32.mrb[0].mxu0
        %v1288 = vadd.f32 %v753, %v1287
        %v1289 = vpop.f32.mrb[0].mxu0
        %v1290 = vadd.f32 %v749, %v1289
        %v1291 = vpop.f32.mrb[0].mxu0
        %v1292 = vadd.f32 %v753, %v1291
        %1293 = vmatprep.mubr.bf16.mxu0 0
        %1294 = vmatmul.mubr.bf16.gmra.mrb[0].mxu0 %v703
        %v1295 = vpop.f32.mrb[0].mxu0
        %v1296 = vadd.f32 %v749, %v1295
        %v1297 = vpop.f32.mrb[0].mxu0
        %v1298 = vadd.f32 %v753, %v1297
        %v1299 = vpop.f32.mrb[0].mxu0
        %v1300 = vadd.f32 %v749, %v1299
        %v1301 = vpop.f32.mrb[0].mxu0
        %v1302 = vadd.f32 %v753, %v1301
        %1303 = vdwg.mxu0
        %v1304 = vmax.f32 %v953, 0.0
        %v1305 = vmax.f32 %v955, 0.0
        %v1306 = vmax.f32 %v1146, 0.0
        %v1307 = vmax.f32 %v1148, 0.0
        %v1308 = vmax.f32 %v957, 0.0
        %v1309 = vmax.f32 %v959, 0.0
        %v1310 = vmax.f32 %v1150, 0.0
        %v1311 = vmax.f32 %v1152, 0.0
        %v1312 = vmax.f32 %v963, 0.0
        %v1313 = vmax.f32 %v965, 0.0
        %v1314 = vmax.f32 %v1156, 0.0
        %v1315 = vmax.f32 %v1158, 0.0
        %v1316 = vmax.f32 %v967, 0.0
        %v1317 = vmax.f32 %v969, 0.0
        %v1318 = vmax.f32 %v1160, 0.0
        %v1319 = vmax.f32 %v1162, 0.0
        %v1320 = vmax.f32 %v973, 0.0
        %v1321 = vmax.f32 %v975, 0.0
        %v1322 = vmax.f32 %v1166, 0.0
        %v1323 = vmax.f32 %v1168, 0.0
        %v1324 = vmax.f32 %v977, 0.0
        %v1325 = vmax.f32 %v979, 0.0
        %v1326 = vmax.f32 %v1170, 0.0
        %v1327 = vmax.f32 %v1172, 0.0
        %v1328 = vmax.f32 %v983, 0.0
        %v1329 = vmax.f32 %v985, 0.0
        %v1330 = vmax.f32 %v1176, 0.0
        %v1331 = vmax.f32 %v1178, 0.0
        %v1332 = vmax.f32 %v987, 0.0
        %v1333 = vmax.f32 %v989, 0.0
        %v1334 = vmax.f32 %v1180, 0.0
        %v1335 = vmax.f32 %v1182, 0.0
        %v1336 = vmax.f32 %v993, 0.0
        %v1337 = vmax.f32 %v995, 0.0
        %v1338 = vmax.f32 %v1186, 0.0
        %v1339 = vmax.f32 %v1188, 0.0
        %v1340 = vmax.f32 %v997, 0.0
        %v1341 = vmax.f32 %v999, 0.0
        %v1342 = vmax.f32 %v1190, 0.0
        %v1343 = vmax.f32 %v1192, 0.0
        %v1344 = vmax.f32 %v1003, 0.0
        %v1345 = vmax.f32 %v1005, 0.0
        %v1346 = vmax.f32 %v1196, 0.0
        %v1347 = vmax.f32 %v1198, 0.0
        %v1348 = vmax.f32 %v1007, 0.0
        %v1349 = vmax.f32 %v1009, 0.0
        %v1350 = vmax.f32 %v1200, 0.0
        %v1351 = vmax.f32 %v1202, 0.0
        %v1352 = vmax.f32 %v1013, 0.0
        %v1353 = vmax.f32 %v1015, 0.0
        %v1354 = vmax.f32 %v1206, 0.0
        %v1355 = vmax.f32 %v1208, 0.0
        %v1356 = vmax.f32 %v1017, 0.0
        %v1357 = vmax.f32 %v1019, 0.0
        %v1358 = vmax.f32 %v1210, 0.0
        %v1359 = vmax.f32 %v1212, 0.0
        %v1360 = vmax.f32 %v1023, 0.0
        %v1361 = vmax.f32 %v1025, 0.0
        %v1362 = vmax.f32 %v1216, 0.0
        %v1363 = vmax.f32 %v1218, 0.0
        %v1364 = vmax.f32 %v1027, 0.0
        %v1365 = vmax.f32 %v1029, 0.0
        %v1366 = vmax.f32 %v1220, 0.0
        %v1367 = vmax.f32 %v1222, 0.0
        %v1368 = vmax.f32 %v1033, 0.0
        %v1369 = vmax.f32 %v1035, 0.0
        %v1370 = vmax.f32 %v1226, 0.0
        %v1371 = vmax.f32 %v1228, 0.0
        %v1372 = vmax.f32 %v1037, 0.0
        %v1373 = vmax.f32 %v1039, 0.0
        %v1374 = vmax.f32 %v1230, 0.0
        %v1375 = vmax.f32 %v1232, 0.0
        %v1376 = vmax.f32 %v1043, 0.0
        %v1377 = vmax.f32 %v1045, 0.0
        %v1378 = vmax.f32 %v1236, 0.0
        %v1379 = vmax.f32 %v1238, 0.0
        %v1380 = vmax.f32 %v1047, 0.0
        %v1381 = vmax.f32 %v1049, 0.0
        %v1382 = vmax.f32 %v1240, 0.0
        %v1383 = vmax.f32 %v1242, 0.0
        %v1384 = vmax.f32 %v1053, 0.0
        %v1385 = vmax.f32 %v1055, 0.0
        %v1386 = vmax.f32 %v1246, 0.0
        %v1387 = vmax.f32 %v1248, 0.0
        %v1388 = vmax.f32 %v1057, 0.0
        %v1389 = vmax.f32 %v1059, 0.0
        %v1390 = vmax.f32 %v1250, 0.0
        %v1391 = vmax.f32 %v1252, 0.0
        %v1392 = vmax.f32 %v1063, 0.0
        %v1393 = vmax.f32 %v1065, 0.0
        %v1394 = vmax.f32 %v1256, 0.0
        %v1395 = vmax.f32 %v1258, 0.0
        %v1396 = vmax.f32 %v1067, 0.0
        %v1397 = vmax.f32 %v1069, 0.0
        %v1398 = vmax.f32 %v1260, 0.0
        %v1399 = vmax.f32 %v1262, 0.0
        %v1400 = vmax.f32 %v1073, 0.0
        %v1401 = vmax.f32 %v1075, 0.0
        %v1402 = vmax.f32 %v1266, 0.0
        %v1403 = vmax.f32 %v1268, 0.0
        %v1404 = vmax.f32 %v1077, 0.0
        %v1405 = vmax.f32 %v1079, 0.0
        %v1406 = vmax.f32 %v1270, 0.0
        %v1407 = vmax.f32 %v1272, 0.0
        %v1408 = vmax.f32 %v1083, 0.0
        %v1409 = vmax.f32 %v1085, 0.0
        %v1410 = vmax.f32 %v1276, 0.0
        %v1411 = vmax.f32 %v1278, 0.0
        %v1412 = vmax.f32 %v1087, 0.0
        %v1413 = vmax.f32 %v1089, 0.0
        %v1414 = vmax.f32 %v1280, 0.0
        %v1415 = vmax.f32 %v1282, 0.0
        %v1416 = vmax.f32 %v1093, 0.0
        %v1417 = vmax.f32 %v1095, 0.0
        %v1418 = vmax.f32 %v1286, 0.0
        %v1419 = vmax.f32 %v1288, 0.0
        %v1420 = vmax.f32 %v1097, 0.0
        %v1421 = vmax.f32 %v1099, 0.0
        %v1422 = vmax.f32 %v1290, 0.0
        %v1423 = vmax.f32 %v1292, 0.0
        %v1424 = vmax.f32 %v1103, 0.0
        %v1425 = vmax.f32 %v1105, 0.0
        %v1426 = vmax.f32 %v1296, 0.0
        %v1427 = vmax.f32 %v1298, 0.0
        %v1428 = vmax.f32 %v1107, 0.0
        %v1429 = vmax.f32 %v1109, 0.0
        %v1430 = vmax.f32 %v1300, 0.0
        %v1431 = vmax.f32 %v1302, 0.0
        %v1432 = vpack.c.bf16 %v1308, %v1304
        %v1433 = vpack.c.bf16 %v1309, %v1305
        %v1434 = vpack.c.bf16 %v1310, %v1306
        %v1435 = vpack.c.bf16 %v1311, %v1307
        %v1436 = vpack.c.bf16 %v1316, %v1312
        %v1437 = vpack.c.bf16 %v1317, %v1313
        %v1438 = vpack.c.bf16 %v1318, %v1314
        %v1439 = vpack.c.bf16 %v1319, %v1315
        %v1440 = vpack.c.bf16 %v1324, %v1320
        %v1441 = vpack.c.bf16 %v1325, %v1321
        %v1442 = vpack.c.bf16 %v1326, %v1322
        %v1443 = vpack.c.bf16 %v1327, %v1323
        %v1444 = vpack.c.bf16 %v1332, %v1328
        %v1445 = vpack.c.bf16 %v1333, %v1329
        %v1446 = vpack.c.bf16 %v1334, %v1330
        %v1447 = vpack.c.bf16 %v1335, %v1331
        %v1448 = vpack.c.bf16 %v1340, %v1336
        %v1449 = vpack.c.bf16 %v1341, %v1337
        %v1450 = vpack.c.bf16 %v1342, %v1338
        %v1451 = vpack.c.bf16 %v1343, %v1339
        %v1452 = vpack.c.bf16 %v1348, %v1344
        %v1453 = vpack.c.bf16 %v1349, %v1345
        %v1454 = vpack.c.bf16 %v1350, %v1346
        %v1455 = vpack.c.bf16 %v1351, %v1347
        %v1456 = vpack.c.bf16 %v1356, %v1352
        %v1457 = vpack.c.bf16 %v1357, %v1353
        %v1458 = vpack.c.bf16 %v1358, %v1354
        %v1459 = vpack.c.bf16 %v1359, %v1355
        %v1460 = vpack.c.bf16 %v1364, %v1360
        %v1461 = vpack.c.bf16 %v1365, %v1361
        %v1462 = vpack.c.bf16 %v1366, %v1362
        %v1463 = vpack.c.bf16 %v1367, %v1363
        %v1464 = vpack.c.bf16 %v1372, %v1368
        %v1465 = vpack.c.bf16 %v1373, %v1369
        %v1466 = vpack.c.bf16 %v1374, %v1370
        %v1467 = vpack.c.bf16 %v1375, %v1371
        %v1468 = vpack.c.bf16 %v1380, %v1376
        %v1469 = vpack.c.bf16 %v1381, %v1377
        %v1470 = vpack.c.bf16 %v1382, %v1378
        %v1471 = vpack.c.bf16 %v1383, %v1379
        %v1472 = vpack.c.bf16 %v1388, %v1384
        %v1473 = vpack.c.bf16 %v1389, %v1385
        %v1474 = vpack.c.bf16 %v1390, %v1386
        %v1475 = vpack.c.bf16 %v1391, %v1387
        %v1476 = vpack.c.bf16 %v1396, %v1392
        %v1477 = vpack.c.bf16 %v1397, %v1393
        %v1478 = vpack.c.bf16 %v1398, %v1394
        %v1479 = vpack.c.bf16 %v1399, %v1395
        %v1480 = vpack.c.bf16 %v1404, %v1400
        %v1481 = vpack.c.bf16 %v1405, %v1401
        %v1482 = vpack.c.bf16 %v1406, %v1402
        %v1483 = vpack.c.bf16 %v1407, %v1403
        %v1484 = vpack.c.bf16 %v1412, %v1408
        %v1485 = vpack.c.bf16 %v1413, %v1409
        %v1486 = vpack.c.bf16 %v1414, %v1410
        %v1487 = vpack.c.bf16 %v1415, %v1411
        %v1488 = vpack.c.bf16 %v1420, %v1416
        %v1489 = vpack.c.bf16 %v1421, %v1417
        %v1490 = vpack.c.bf16 %v1422, %v1418
        %v1491 = vpack.c.bf16 %v1423, %v1419
        %v1492 = vpack.c.bf16 %v1428, %v1424
        %v1493 = vpack.c.bf16 %v1429, %v1425
        %v1494 = vpack.c.bf16 %v1430, %v1426
        %v1495 = vpack.c.bf16 %v1431, %v1427
        %v1496 = vld [vmem:[#allocation8] sm:$0xf]
        %v1497 = vld [vmem:[#allocation8 + $0x4] sm:$0xf]
        %v1498 = vld [vmem:[#allocation8 + $0x8] sm:$0xf]
        %v1499 = vld [vmem:[#allocation8 + $0xc] sm:$0xf]
        %v1500 = vld [vmem:[#allocation8 + $0x10] sm:$0xf]
        %v1501 = vld [vmem:[#allocation8 + $0x14] sm:$0xf]
        %v1502 = vld [vmem:[#allocation8 + $0x18] sm:$0xf]
        %v1503 = vld [vmem:[#allocation8 + $0x1c] sm:$0xf]
        %v1504 = vld [vmem:[#allocation8 + $0x20] sm:$0xf]
        %v1505 = vld [vmem:[#allocation8 + $0x24] sm:$0xf]
        %v1506 = vld [vmem:[#allocation8 + $0x28] sm:$0xf]
        %v1507 = vld [vmem:[#allocation8 + $0x2c] sm:$0xf]
        %v1508 = vld [vmem:[#allocation8 + $0x30] sm:$0xf]
        %v1509 = vld [vmem:[#allocation8 + $0x34] sm:$0xf]
        %v1510 = vld [vmem:[#allocation8 + $0x38] sm:$0xf]
        %v1511 = vld [vmem:[#allocation8 + $0x3c] sm:$0xf]
        %v1512 = vld [vmem:[#allocation8 + $0x40] sm:$0xf]
        %v1513 = vld [vmem:[#allocation8 + $0x44] sm:$0xf]
        %v1514 = vld [vmem:[#allocation8 + $0x48] sm:$0xf]
        %v1515 = vld [vmem:[#allocation8 + $0x4c] sm:$0xf]
        %v1516 = vld [vmem:[#allocation8 + $0x50] sm:$0xf]
        %v1517 = vld [vmem:[#allocation8 + $0x54] sm:$0xf]
        %v1518 = vld [vmem:[#allocation8 + $0x58] sm:$0xf]
        %v1519 = vld [vmem:[#allocation8 + $0x5c] sm:$0xf]
        %v1520 = vld [vmem:[#allocation8 + $0x60] sm:$0xf]
        %v1521 = vld [vmem:[#allocation8 + $0x64] sm:$0xf]
        %v1522 = vld [vmem:[#allocation8 + $0x68] sm:$0xf]
        %v1523 = vld [vmem:[#allocation8 + $0x6c] sm:$0xf]
        %v1524 = vld [vmem:[#allocation8 + $0x70] sm:$0xf]
        %v1525 = vld [vmem:[#allocation8 + $0x74] sm:$0xf]
        %v1526 = vld [vmem:[#allocation8 + $0x78] sm:$0xf]
        %v1527 = vld [vmem:[#allocation8 + $0x7c] sm:$0xf]
        %v1528 = vld [vmem:[#allocation8 + $0x80] sm:$0xf]
        %v1529 = vld [vmem:[#allocation8 + $0x84] sm:$0xf]
        %v1530 = vld [vmem:[#allocation8 + $0x88] sm:$0xf]
        %v1531 = vld [vmem:[#allocation8 + $0x8c] sm:$0xf]
        %v1532 = vld [vmem:[#allocation8 + $0x90] sm:$0xf]
        %v1533 = vld [vmem:[#allocation8 + $0x94] sm:$0xf]
        %v1534 = vld [vmem:[#allocation8 + $0x98] sm:$0xf]
        %v1535 = vld [vmem:[#allocation8 + $0x9c] sm:$0xf]
        %v1536 = vld [vmem:[#allocation8 + $0xa0] sm:$0xf]
        %v1537 = vld [vmem:[#allocation8 + $0xa4] sm:$0xf]
        %v1538 = vld [vmem:[#allocation8 + $0xa8] sm:$0xf]
        %v1539 = vld [vmem:[#allocation8 + $0xac] sm:$0xf]
        %v1540 = vld [vmem:[#allocation8 + $0xb0] sm:$0xf]
        %v1541 = vld [vmem:[#allocation8 + $0xb4] sm:$0xf]
        %v1542 = vld [vmem:[#allocation8 + $0xb8] sm:$0xf]
        %v1543 = vld [vmem:[#allocation8 + $0xbc] sm:$0xf]
        %v1544 = vld [vmem:[#allocation8 + $0xc0] sm:$0xf]
        %v1545 = vld [vmem:[#allocation8 + $0xc4] sm:$0xf]
        %v1546 = vld [vmem:[#allocation8 + $0xc8] sm:$0xf]
        %v1547 = vld [vmem:[#allocation8 + $0xcc] sm:$0xf]
        %v1548 = vld [vmem:[#allocation8 + $0xd0] sm:$0xf]
        %v1549 = vld [vmem:[#allocation8 + $0xd4] sm:$0xf]
        %v1550 = vld [vmem:[#allocation8 + $0xd8] sm:$0xf]
        %v1551 = vld [vmem:[#allocation8 + $0xdc] sm:$0xf]
        %v1552 = vld [vmem:[#allocation8 + $0xe0] sm:$0xf]
        %v1553 = vld [vmem:[#allocation8 + $0xe4] sm:$0xf]
        %v1554 = vld [vmem:[#allocation8 + $0xe8] sm:$0xf]
        %v1555 = vld [vmem:[#allocation8 + $0xec] sm:$0xf]
        %v1556 = vld [vmem:[#allocation8 + $0xf0] sm:$0xf]
        %v1557 = vld [vmem:[#allocation8 + $0xf4] sm:$0xf]
        %v1558 = vld [vmem:[#allocation8 + $0xf8] sm:$0xf]
        %v1559 = vld [vmem:[#allocation8 + $0xfc] sm:$0xf]
        %v1560 = vld [vmem:[%s6] sm:$0x1]
        %v1562 = vlaneseq
        %v1563 = vshrl.u32 %v1562, 7
        %v1564 = vsub.s32 0, %v1563
        %v1565 = vrot.slane %v1560, %v1564
        %v1631 = vunpack.c.l.b16 %v1496
        %v1632 = vunpack.c.l.b16 %v1497
        %v1633 = vunpack.c.l.b16 %v1498
        %v1634 = vunpack.c.l.b16 %v1499
        %v1635 = vunpack.c.l.b16 %v1500
        %v1636 = vunpack.c.l.b16 %v1501
        %v1637 = vunpack.c.l.b16 %v1502
        %v1638 = vunpack.c.l.b16 %v1503
        %v1639 = vunpack.c.l.b16 %v1504
        %v1640 = vunpack.c.l.b16 %v1505
        %v1641 = vunpack.c.l.b16 %v1506
        %v1642 = vunpack.c.l.b16 %v1507
        %v1643 = vunpack.c.l.b16 %v1508
        %v1644 = vunpack.c.l.b16 %v1509
        %v1645 = vunpack.c.l.b16 %v1510
        %v1646 = vunpack.c.l.b16 %v1511
        %v1647 = vunpack.c.l.b16 %v1512
        %v1648 = vunpack.c.l.b16 %v1513
        %v1649 = vunpack.c.l.b16 %v1514
        %v1650 = vunpack.c.l.b16 %v1515
        %v1651 = vunpack.c.l.b16 %v1516
        %v1652 = vunpack.c.l.b16 %v1517
        %v1653 = vunpack.c.l.b16 %v1518
        %v1654 = vunpack.c.l.b16 %v1519
        %v1655 = vunpack.c.l.b16 %v1520
        %v1656 = vunpack.c.l.b16 %v1521
        %v1657 = vunpack.c.l.b16 %v1522
        %v1658 = vunpack.c.l.b16 %v1523
        %v1659 = vunpack.c.l.b16 %v1524
        %v1660 = vunpack.c.l.b16 %v1525
        %v1661 = vunpack.c.l.b16 %v1526
        %v1662 = vunpack.c.l.b16 %v1527
        %v1663 = vunpack.c.l.b16 %v1528
        %v1664 = vunpack.c.l.b16 %v1529
        %v1665 = vunpack.c.l.b16 %v1530
        %v1666 = vunpack.c.l.b16 %v1531
        %v1667 = vunpack.c.l.b16 %v1532
        %v1668 = vunpack.c.l.b16 %v1533
        %v1669 = vunpack.c.l.b16 %v1534
        %v1670 = vunpack.c.l.b16 %v1535
        %v1671 = vunpack.c.l.b16 %v1536
        %v1672 = vunpack.c.l.b16 %v1537
        %v1673 = vunpack.c.l.b16 %v1538
        %v1674 = vunpack.c.l.b16 %v1539
        %v1675 = vunpack.c.l.b16 %v1540
        %v1676 = vunpack.c.l.b16 %v1541
        %v1677 = vunpack.c.l.b16 %v1542
        %v1678 = vunpack.c.l.b16 %v1543
        %v1679 = vunpack.c.l.b16 %v1544
        %v1680 = vunpack.c.l.b16 %v1545
        %v1681 = vunpack.c.l.b16 %v1546
        %v1682 = vunpack.c.l.b16 %v1547
        %v1683 = vunpack.c.l.b16 %v1548
        %v1684 = vunpack.c.l.b16 %v1549
        %v1685 = vunpack.c.l.b16 %v1550
        %v1686 = vunpack.c.l.b16 %v1551
        %v1687 = vunpack.c.l.b16 %v1552
        %v1688 = vunpack.c.l.b16 %v1553
        %v1689 = vunpack.c.l.b16 %v1554
        %v1690 = vunpack.c.l.b16 %v1555
        %v1691 = vunpack.c.l.b16 %v1556
        %v1692 = vunpack.c.l.b16 %v1557
        %v1693 = vunpack.c.l.b16 %v1558
        %v1694 = vunpack.c.l.b16 %v1559
        %v1695 = vpack.c.b16 %v1632, %v1631
        %v1696 = vpack.c.b16 %v1634, %v1633
        %v1697 = vpack.c.b16 %v1636, %v1635
        %v1698 = vpack.c.b16 %v1638, %v1637
        %v1699 = vpack.c.b16 %v1640, %v1639
        %v1700 = vpack.c.b16 %v1642, %v1641
        %v1701 = vpack.c.b16 %v1644, %v1643
        %v1702 = vpack.c.b16 %v1646, %v1645
        %v1703 = vpack.c.b16 %v1648, %v1647
        %v1704 = vpack.c.b16 %v1650, %v1649
        %v1705 = vpack.c.b16 %v1652, %v1651
        %v1706 = vpack.c.b16 %v1654, %v1653
        %v1707 = vpack.c.b16 %v1656, %v1655
        %v1708 = vpack.c.b16 %v1658, %v1657
        %v1709 = vpack.c.b16 %v1660, %v1659
        %v1710 = vpack.c.b16 %v1662, %v1661
        %v1711 = vpack.c.b16 %v1664, %v1663
        %v1712 = vpack.c.b16 %v1666, %v1665
        %v1713 = vpack.c.b16 %v1668, %v1667
        %v1714 = vpack.c.b16 %v1670, %v1669
        %v1715 = vpack.c.b16 %v1672, %v1671
        %v1716 = vpack.c.b16 %v1674, %v1673
        %v1717 = vpack.c.b16 %v1676, %v1675
        %v1718 = vpack.c.b16 %v1678, %v1677
        %v1719 = vpack.c.b16 %v1680, %v1679
        %v1720 = vpack.c.b16 %v1682, %v1681
        %v1721 = vpack.c.b16 %v1684, %v1683
        %v1722 = vpack.c.b16 %v1686, %v1685
        %v1723 = vpack.c.b16 %v1688, %v1687
        %v1724 = vpack.c.b16 %v1690, %v1689
        %v1725 = vpack.c.b16 %v1692, %v1691
        %v1726 = vpack.c.b16 %v1694, %v1693
        %1759 = vmatprep.subr.bf16.mxu0 0
        %1760 = vmatpush1.bf16.msra.mxu0 %v1695
        %1761 = vmatprep.subr.bf16.mxu0 0
        %1762 = vmatpush1.bf16.msra.mxu0 %v1696
        %1763 = vmatprep.subr.bf16.mxu0 0
        %1764 = vmatpush1.bf16.msra.mxu0 %v1697
        %1765 = vmatprep.subr.bf16.mxu0 0
        %1766 = vmatpush1.bf16.msra.mxu0 %v1698
        %1767 = vmatprep.subr.bf16.mxu0 0
        %1768 = vmatpush1.bf16.msra.mxu0 %v1699
        %1769 = vmatprep.subr.bf16.mxu0 0
        %1770 = vmatpush1.bf16.msra.mxu0 %v1700
        %1771 = vmatprep.subr.bf16.mxu0 0
        %1772 = vmatpush1.bf16.msra.mxu0 %v1701
        %1773 = vmatprep.subr.bf16.mxu0 0
        %1774 = vmatpush1.bf16.msra.mxu0 %v1702
        %1775 = vmatprep.subr.bf16.mxu0 0
        %1776 = vmatpush1.bf16.msra.mxu0 %v1703
        %1777 = vmatprep.subr.bf16.mxu0 0
        %1778 = vmatpush1.bf16.msra.mxu0 %v1704
        %1779 = vmatprep.subr.bf16.mxu0 0
        %1780 = vmatpush1.bf16.msra.mxu0 %v1705
        %1781 = vmatprep.subr.bf16.mxu0 0
        %1782 = vmatpush1.bf16.msra.mxu0 %v1706
        %1783 = vmatprep.subr.bf16.mxu0 0
        %1784 = vmatpush1.bf16.msra.mxu0 %v1707
        %1785 = vmatprep.subr.bf16.mxu0 0
        %1786 = vmatpush1.bf16.msra.mxu0 %v1708
        %1787 = vmatprep.subr.bf16.mxu0 0
        %1788 = vmatpush1.bf16.msra.mxu0 %v1709
        %1789 = vmatprep.subr.bf16.mxu0 0
        %1790 = vmatpush1.bf16.msra.mxu0 %v1710
        %1791 = vmatprep.mubr.bf16.mxu0 %v1433
        %1792 = vmatmul.mubr.bf16.gmra.mrb[0].mxu0 %v1432
        %v1793 = vpop.f32.mrb[0].mxu0
        %v1794 = vadd.f32 %v1565, %v1793
        %v1795 = vpop.f32.mrb[0].mxu0
        %v1796 = vpop.f32.mrb[0].mxu0
        %v1797 = vadd.f32 %v1565, %v1796
        %v1798 = vpop.f32.mrb[0].mxu0
        %1799 = vmatprep.mubr.bf16.mxu0 %v1437
        %1800 = vmatmul.mubr.bf16.gmra.mrb[0].mxu0 %v1436
        %v1801 = vpop.f32.mrb[0].mxu0
        %v1802 = vadd.f32 %v1565, %v1801
        %v1803 = vpop.f32.mrb[0].mxu0
        %v1804 = vpop.f32.mrb[0].mxu0
        %v1805 = vadd.f32 %v1565, %v1804
        %v1806 = vpop.f32.mrb[0].mxu0
        %1807 = vmatprep.mubr.bf16.mxu0 %v1441
        %1808 = vmatmul.mubr.bf16.gmra.mrb[0].mxu0 %v1440
        %v1809 = vpop.f32.mrb[0].mxu0
        %v1810 = vadd.f32 %v1565, %v1809
        %v1811 = vpop.f32.mrb[0].mxu0
        %v1812 = vpop.f32.mrb[0].mxu0
        %v1813 = vadd.f32 %v1565, %v1812
        %v1814 = vpop.f32.mrb[0].mxu0
        %1815 = vmatprep.mubr.bf16.mxu0 %v1445
        %1816 = vmatmul.mubr.bf16.gmra.mrb[0].mxu0 %v1444
        %v1817 = vpop.f32.mrb[0].mxu0
        %v1818 = vadd.f32 %v1565, %v1817
        %v1819 = vpop.f32.mrb[0].mxu0
        %v1820 = vpop.f32.mrb[0].mxu0
        %v1821 = vadd.f32 %v1565, %v1820
        %v1822 = vpop.f32.mrb[0].mxu0
        %1823 = vmatprep.mubr.bf16.mxu0 %v1449
        %1824 = vmatmul.mubr.bf16.gmra.mrb[0].mxu0 %v1448
        %v1825 = vpop.f32.mrb[0].mxu0
        %v1826 = vadd.f32 %v1565, %v1825
        %v1827 = vpop.f32.mrb[0].mxu0
        %v1828 = vpop.f32.mrb[0].mxu0
        %v1829 = vadd.f32 %v1565, %v1828
        %v1830 = vpop.f32.mrb[0].mxu0
        %1831 = vmatprep.mubr.bf16.mxu0 %v1453
        %1832 = vmatmul.mubr.bf16.gmra.mrb[0].mxu0 %v1452
        %v1833 = vpop.f32.mrb[0].mxu0
        %v1834 = vadd.f32 %v1565, %v1833
        %v1835 = vpop.f32.mrb[0].mxu0
        %v1836 = vpop.f32.mrb[0].mxu0
        %v1837 = vadd.f32 %v1565, %v1836
        %v1838 = vpop.f32.mrb[0].mxu0
        %1839 = vmatprep.mubr.bf16.mxu0 %v1457
        %1840 = vmatmul.mubr.bf16.gmra.mrb[0].mxu0 %v1456
        %v1841 = vpop.f32.mrb[0].mxu0
        %v1842 = vadd.f32 %v1565, %v1841
        %v1843 = vpop.f32.mrb[0].mxu0
        %v1844 = vpop.f32.mrb[0].mxu0
        %v1845 = vadd.f32 %v1565, %v1844
        %v1846 = vpop.f32.mrb[0].mxu0
        %1847 = vmatprep.mubr.bf16.mxu0 %v1461
        %1848 = vmatmul.mubr.bf16.gmra.mrb[0].mxu0 %v1460
        %v1849 = vpop.f32.mrb[0].mxu0
        %v1850 = vadd.f32 %v1565, %v1849
        %v1851 = vpop.f32.mrb[0].mxu0
        %v1852 = vpop.f32.mrb[0].mxu0
        %v1853 = vadd.f32 %v1565, %v1852
        %v1854 = vpop.f32.mrb[0].mxu0
        %1855 = vmatprep.mubr.bf16.mxu0 %v1465
        %1856 = vmatmul.mubr.bf16.gmra.mrb[0].mxu0 %v1464
        %v1857 = vpop.f32.mrb[0].mxu0
        %v1858 = vadd.f32 %v1565, %v1857
        %v1859 = vpop.f32.mrb[0].mxu0
        %v1860 = vpop.f32.mrb[0].mxu0
        %v1861 = vadd.f32 %v1565, %v1860
        %v1862 = vpop.f32.mrb[0].mxu0
        %1863 = vmatprep.mubr.bf16.mxu0 %v1469
        %1864 = vmatmul.mubr.bf16.gmra.mrb[0].mxu0 %v1468
        %v1865 = vpop.f32.mrb[0].mxu0
        %v1866 = vadd.f32 %v1565, %v1865
        %v1867 = vpop.f32.mrb[0].mxu0
        %v1868 = vpop.f32.mrb[0].mxu0
        %v1869 = vadd.f32 %v1565, %v1868
        %v1870 = vpop.f32.mrb[0].mxu0
        %1871 = vmatprep.mubr.bf16.mxu0 %v1473
        %1872 = vmatmul.mubr.bf16.gmra.mrb[0].mxu0 %v1472
        %v1873 = vpop.f32.mrb[0].mxu0
        %v1874 = vadd.f32 %v1565, %v1873
        %v1875 = vpop.f32.mrb[0].mxu0
        %v1876 = vpop.f32.mrb[0].mxu0
        %v1877 = vadd.f32 %v1565, %v1876
        %v1878 = vpop.f32.mrb[0].mxu0
        %1879 = vmatprep.mubr.bf16.mxu0 %v1477
        %1880 = vmatmul.mubr.bf16.gmra.mrb[0].mxu0 %v1476
        %v1881 = vpop.f32.mrb[0].mxu0
        %v1882 = vadd.f32 %v1565, %v1881
        %v1883 = vpop.f32.mrb[0].mxu0
        %v1884 = vpop.f32.mrb[0].mxu0
        %v1885 = vadd.f32 %v1565, %v1884
        %v1886 = vpop.f32.mrb[0].mxu0
        %1887 = vmatprep.mubr.bf16.mxu0 %v1481
        %1888 = vmatmul.mubr.bf16.gmra.mrb[0].mxu0 %v1480
        %v1889 = vpop.f32.mrb[0].mxu0
        %v1890 = vadd.f32 %v1565, %v1889
        %v1891 = vpop.f32.mrb[0].mxu0
        %v1892 = vpop.f32.mrb[0].mxu0
        %v1893 = vadd.f32 %v1565, %v1892
        %v1894 = vpop.f32.mrb[0].mxu0
        %1895 = vmatprep.mubr.bf16.mxu0 %v1485
        %1896 = vmatmul.mubr.bf16.gmra.mrb[0].mxu0 %v1484
        %v1897 = vpop.f32.mrb[0].mxu0
        %v1898 = vadd.f32 %v1565, %v1897
        %v1899 = vpop.f32.mrb[0].mxu0
        %v1900 = vpop.f32.mrb[0].mxu0
        %v1901 = vadd.f32 %v1565, %v1900
        %v1902 = vpop.f32.mrb[0].mxu0
        %1903 = vmatprep.mubr.bf16.mxu0 %v1489
        %1904 = vmatmul.mubr.bf16.gmra.mrb[0].mxu0 %v1488
        %v1905 = vpop.f32.mrb[0].mxu0
        %v1906 = vadd.f32 %v1565, %v1905
        %v1907 = vpop.f32.mrb[0].mxu0
        %v1908 = vpop.f32.mrb[0].mxu0
        %v1909 = vadd.f32 %v1565, %v1908
        %v1910 = vpop.f32.mrb[0].mxu0
        %1911 = vmatprep.mubr.bf16.mxu0 %v1493
        %1912 = vmatmul.mubr.bf16.gmra.mrb[0].mxu0 %v1492
        %v1913 = vpop.f32.mrb[0].mxu0
        %v1914 = vadd.f32 %v1565, %v1913
        %v1915 = vpop.f32.mrb[0].mxu0
        %v1916 = vpop.f32.mrb[0].mxu0
        %v1917 = vadd.f32 %v1565, %v1916
        %v1918 = vpop.f32.mrb[0].mxu0
        %1919 = vdwg.mxu0
        %1920 = vmatprep.subr.bf16.mxu0 0
        %1921 = vmatpush1.bf16.msra.mxu0 %v1711
        %1922 = vmatprep.subr.bf16.mxu0 0
        %1923 = vmatpush1.bf16.msra.mxu0 %v1712
        %1924 = vmatprep.subr.bf16.mxu0 0
        %1925 = vmatpush1.bf16.msra.mxu0 %v1713
        %1926 = vmatprep.subr.bf16.mxu0 0
        %1927 = vmatpush1.bf16.msra.mxu0 %v1714
        %1928 = vmatprep.subr.bf16.mxu0 0
        %1929 = vmatpush1.bf16.msra.mxu0 %v1715
        %1930 = vmatprep.subr.bf16.mxu0 0
        %1931 = vmatpush1.bf16.msra.mxu0 %v1716
        %1932 = vmatprep.subr.bf16.mxu0 0
        %1933 = vmatpush1.bf16.msra.mxu0 %v1717
        %1934 = vmatprep.subr.bf16.mxu0 0
        %1935 = vmatpush1.bf16.msra.mxu0 %v1718
        %1936 = vmatprep.subr.bf16.mxu0 0
        %1937 = vmatpush1.bf16.msra.mxu0 %v1719
        %1938 = vmatprep.subr.bf16.mxu0 0
        %1939 = vmatpush1.bf16.msra.mxu0 %v1720
        %1940 = vmatprep.subr.bf16.mxu0 0
        %1941 = vmatpush1.bf16.msra.mxu0 %v1721
        %1942 = vmatprep.subr.bf16.mxu0 0
        %1943 = vmatpush1.bf16.msra.mxu0 %v1722
        %1944 = vmatprep.subr.bf16.mxu0 0
        %1945 = vmatpush1.bf16.msra.mxu0 %v1723
        %1946 = vmatprep.subr.bf16.mxu0 0
        %1947 = vmatpush1.bf16.msra.mxu0 %v1724
        %1948 = vmatprep.subr.bf16.mxu0 0
        %1949 = vmatpush1.bf16.msra.mxu0 %v1725
        %1950 = vmatprep.subr.bf16.mxu0 0
        %1951 = vmatpush1.bf16.msra.mxu0 %v1726
        %1952 = vmatprep.mubr.bf16.mxu0 %v1435
        %1953 = vmatmul.mubr.bf16.gmra.mrb[0].mxu0 %v1434
        %v1954 = vpop.f32.mrb[0].mxu0
        %v1955 = vadd.f32 %v1794, %v1954
        %v1956 = vpop.f32.mrb[0].mxu0
        %v1957 = vpop.f32.mrb[0].mxu0
        %v1958 = vadd.f32 %v1797, %v1957
        %v1959 = vpop.f32.mrb[0].mxu0
        %1960 = vmatprep.mubr.bf16.mxu0 %v1439
        %1961 = vmatmul.mubr.bf16.gmra.mrb[0].mxu0 %v1438
        %v1962 = vpop.f32.mrb[0].mxu0
        %v1963 = vadd.f32 %v1802, %v1962
        %v1964 = vpop.f32.mrb[0].mxu0
        %v1965 = vpop.f32.mrb[0].mxu0
        %v1966 = vadd.f32 %v1805, %v1965
        %v1967 = vpop.f32.mrb[0].mxu0
        %1968 = vmatprep.mubr.bf16.mxu0 %v1443
        %1969 = vmatmul.mubr.bf16.gmra.mrb[0].mxu0 %v1442
        %v1970 = vpop.f32.mrb[0].mxu0
        %v1971 = vadd.f32 %v1810, %v1970
        %v1972 = vpop.f32.mrb[0].mxu0
        %v1973 = vpop.f32.mrb[0].mxu0
        %v1974 = vadd.f32 %v1813, %v1973
        %v1975 = vpop.f32.mrb[0].mxu0
        %1976 = vmatprep.mubr.bf16.mxu0 %v1447
        %1977 = vmatmul.mubr.bf16.gmra.mrb[0].mxu0 %v1446
        %v1978 = vpop.f32.mrb[0].mxu0
        %v1979 = vadd.f32 %v1818, %v1978
        %v1980 = vpop.f32.mrb[0].mxu0
        %v1981 = vpop.f32.mrb[0].mxu0
        %v1982 = vadd.f32 %v1821, %v1981
        %v1983 = vpop.f32.mrb[0].mxu0
        %1984 = vmatprep.mubr.bf16.mxu0 %v1451
        %1985 = vmatmul.mubr.bf16.gmra.mrb[0].mxu0 %v1450
        %v1986 = vpop.f32.mrb[0].mxu0
        %v1987 = vadd.f32 %v1826, %v1986
        %v1988 = vpop.f32.mrb[0].mxu0
        %v1989 = vpop.f32.mrb[0].mxu0
        %v1990 = vadd.f32 %v1829, %v1989
        %v1991 = vpop.f32.mrb[0].mxu0
        %1992 = vmatprep.mubr.bf16.mxu0 %v1455
        %1993 = vmatmul.mubr.bf16.gmra.mrb[0].mxu0 %v1454
        %v1994 = vpop.f32.mrb[0].mxu0
        %v1995 = vadd.f32 %v1834, %v1994
        %v1996 = vpop.f32.mrb[0].mxu0
        %v1997 = vpop.f32.mrb[0].mxu0
        %v1998 = vadd.f32 %v1837, %v1997
        %v1999 = vpop.f32.mrb[0].mxu0
        %2000 = vmatprep.mubr.bf16.mxu0 %v1459
        %2001 = vmatmul.mubr.bf16.gmra.mrb[0].mxu0 %v1458
        %v2002 = vpop.f32.mrb[0].mxu0
        %v2003 = vadd.f32 %v1842, %v2002
        %v2004 = vpop.f32.mrb[0].mxu0
        %v2005 = vpop.f32.mrb[0].mxu0
        %v2006 = vadd.f32 %v1845, %v2005
        %v2007 = vpop.f32.mrb[0].mxu0
        %2008 = vmatprep.mubr.bf16.mxu0 %v1463
        %2009 = vmatmul.mubr.bf16.gmra.mrb[0].mxu0 %v1462
        %v2010 = vpop.f32.mrb[0].mxu0
        %v2011 = vadd.f32 %v1850, %v2010
        %v2012 = vpop.f32.mrb[0].mxu0
        %v2013 = vpop.f32.mrb[0].mxu0
        %v2014 = vadd.f32 %v1853, %v2013
        %v2015 = vpop.f32.mrb[0].mxu0
        %2016 = vmatprep.mubr.bf16.mxu0 %v1467
        %2017 = vmatmul.mubr.bf16.gmra.mrb[0].mxu0 %v1466
        %v2018 = vpop.f32.mrb[0].mxu0
        %v2019 = vadd.f32 %v1858, %v2018
        %v2020 = vpop.f32.mrb[0].mxu0
        %v2021 = vpop.f32.mrb[0].mxu0
        %v2022 = vadd.f32 %v1861, %v2021
        %v2023 = vpop.f32.mrb[0].mxu0
        %2024 = vmatprep.mubr.bf16.mxu0 %v1471
        %2025 = vmatmul.mubr.bf16.gmra.mrb[0].mxu0 %v1470
        %v2026 = vpop.f32.mrb[0].mxu0
        %v2027 = vadd.f32 %v1866, %v2026
        %v2028 = vpop.f32.mrb[0].mxu0
        %v2029 = vpop.f32.mrb[0].mxu0
        %v2030 = vadd.f32 %v1869, %v2029
        %v2031 = vpop.f32.mrb[0].mxu0
        %2032 = vmatprep.mubr.bf16.mxu0 %v1475
        %2033 = vmatmul.mubr.bf16.gmra.mrb[0].mxu0 %v1474
        %v2034 = vpop.f32.mrb[0].mxu0
        %v2035 = vadd.f32 %v1874, %v2034
        %v2036 = vpop.f32.mrb[0].mxu0
        %v2037 = vpop.f32.mrb[0].mxu0
        %v2038 = vadd.f32 %v1877, %v2037
        %v2039 = vpop.f32.mrb[0].mxu0
        %2040 = vmatprep.mubr.bf16.mxu0 %v1479
        %2041 = vmatmul.mubr.bf16.gmra.mrb[0].mxu0 %v1478
        %v2042 = vpop.f32.mrb[0].mxu0
        %v2043 = vadd.f32 %v1882, %v2042
        %v2044 = vpop.f32.mrb[0].mxu0
        %v2045 = vpop.f32.mrb[0].mxu0
        %v2046 = vadd.f32 %v1885, %v2045
        %v2047 = vpop.f32.mrb[0].mxu0
        %2048 = vmatprep.mubr.bf16.mxu0 %v1483
        %2049 = vmatmul.mubr.bf16.gmra.mrb[0].mxu0 %v1482
        %v2050 = vpop.f32.mrb[0].mxu0
        %v2051 = vadd.f32 %v1890, %v2050
        %v2052 = vpop.f32.mrb[0].mxu0
        %v2053 = vpop.f32.mrb[0].mxu0
        %v2054 = vadd.f32 %v1893, %v2053
        %v2055 = vpop.f32.mrb[0].mxu0
        %2056 = vmatprep.mubr.bf16.mxu0 %v1487
        %2057 = vmatmul.mubr.bf16.gmra.mrb[0].mxu0 %v1486
        %v2058 = vpop.f32.mrb[0].mxu0
        %v2059 = vadd.f32 %v1898, %v2058
        %v2060 = vpop.f32.mrb[0].mxu0
        %v2061 = vpop.f32.mrb[0].mxu0
        %v2062 = vadd.f32 %v1901, %v2061
        %v2063 = vpop.f32.mrb[0].mxu0
        %2064 = vmatprep.mubr.bf16.mxu0 %v1491
        %2065 = vmatmul.mubr.bf16.gmra.mrb[0].mxu0 %v1490
        %v2066 = vpop.f32.mrb[0].mxu0
        %v2067 = vadd.f32 %v1906, %v2066
        %v2068 = vpop.f32.mrb[0].mxu0
        %v2069 = vpop.f32.mrb[0].mxu0
        %v2070 = vadd.f32 %v1909, %v2069
        %v2071 = vpop.f32.mrb[0].mxu0
        %2072 = vmatprep.mubr.bf16.mxu0 %v1495
        %2073 = vmatmul.mubr.bf16.gmra.mrb[0].mxu0 %v1494
        %v2074 = vpop.f32.mrb[0].mxu0
        %v2075 = vadd.f32 %v1914, %v2074
        %v2076 = vpop.f32.mrb[0].mxu0
        %v2077 = vpop.f32.mrb[0].mxu0
        %v2078 = vadd.f32 %v1917, %v2077
        %v2079 = vpop.f32.mrb[0].mxu0
        %2080 = vdwg.mxu0
        %v2081 = vmax.f32 %v1955, 0.0
        %v2082 = vmax.f32 %v1958, 0.0
        %v2083 = vmax.f32 %v1963, 0.0
        %v2084 = vmax.f32 %v1966, 0.0
        %v2085 = vmax.f32 %v1971, 0.0
        %v2086 = vmax.f32 %v1974, 0.0
        %v2087 = vmax.f32 %v1979, 0.0
        %v2088 = vmax.f32 %v1982, 0.0
        %v2089 = vmax.f32 %v1987, 0.0
        %v2090 = vmax.f32 %v1990, 0.0
        %v2091 = vmax.f32 %v1995, 0.0
        %v2092 = vmax.f32 %v1998, 0.0
        %v2093 = vmax.f32 %v2003, 0.0
        %v2094 = vmax.f32 %v2006, 0.0
        %v2095 = vmax.f32 %v2011, 0.0
        %v2096 = vmax.f32 %v2014, 0.0
        %v2097 = vmax.f32 %v2019, 0.0
        %v2098 = vmax.f32 %v2022, 0.0
        %v2099 = vmax.f32 %v2027, 0.0
        %v2100 = vmax.f32 %v2030, 0.0
        %v2101 = vmax.f32 %v2035, 0.0
        %v2102 = vmax.f32 %v2038, 0.0
        %v2103 = vmax.f32 %v2043, 0.0
        %v2104 = vmax.f32 %v2046, 0.0
        %v2105 = vmax.f32 %v2051, 0.0
        %v2106 = vmax.f32 %v2054, 0.0
        %v2107 = vmax.f32 %v2059, 0.0
        %v2108 = vmax.f32 %v2062, 0.0
        %v2109 = vmax.f32 %v2067, 0.0
        %v2110 = vmax.f32 %v2070, 0.0
        %v2111 = vmax.f32 %v2075, 0.0
        %v2112 = vmax.f32 %v2078, 0.0
        %v2113 = vadd.f32 %v656, %v2081
        %v2114 = vadd.f32 %v657, %v2082
        %v2115 = vadd.f32 %v658, %v2083
        %v2116 = vadd.f32 %v659, %v2084
        %v2117 = vadd.f32 %v660, %v2085
        %v2118 = vadd.f32 %v661, %v2086
        %v2119 = vadd.f32 %v662, %v2087
        %v2120 = vadd.f32 %v663, %v2088
        %v2121 = vadd.f32 %v664, %v2089
        %v2122 = vadd.f32 %v665, %v2090
        %v2123 = vadd.f32 %v666, %v2091
        %v2124 = vadd.f32 %v667, %v2092
        %v2125 = vadd.f32 %v668, %v2093
        %v2126 = vadd.f32 %v669, %v2094
        %v2127 = vadd.f32 %v670, %v2095
        %v2128 = vadd.f32 %v671, %v2096
        %v2129 = vadd.f32 %v672, %v2097
        %v2130 = vadd.f32 %v673, %v2098
        %v2131 = vadd.f32 %v674, %v2099
        %v2132 = vadd.f32 %v675, %v2100
        %v2133 = vadd.f32 %v676, %v2101
        %v2134 = vadd.f32 %v677, %v2102
        %v2135 = vadd.f32 %v678, %v2103
        %v2136 = vadd.f32 %v679, %v2104
        %v2137 = vadd.f32 %v680, %v2105
        %v2138 = vadd.f32 %v681, %v2106
        %v2139 = vadd.f32 %v682, %v2107
        %v2140 = vadd.f32 %v683, %v2108
        %v2141 = vadd.f32 %v684, %v2109
        %v2142 = vadd.f32 %v685, %v2110
        %v2143 = vadd.f32 %v686, %v2111
        %v2144 = vadd.f32 %v687, %v2112
        %2145 = vst [vmem:[%s340] sm:$0xff] %v2113
        %2146 = vst [vmem:[%s340 + $0x8] sm:$0xff] %v2114
        %2147 = vst [vmem:[%s340 + $0x10] sm:$0xff] %v2115
        %2148 = vst [vmem:[%s340 + $0x18] sm:$0xff] %v2116
        %2149 = vst [vmem:[%s340 + $0x20] sm:$0xff] %v2117
        %2150 = vst [vmem:[%s340 + $0x28] sm:$0xff] %v2118
        %2151 = vst [vmem:[%s340 + $0x30] sm:$0xff] %v2119
        %2152 = vst [vmem:[%s340 + $0x38] sm:$0xff] %v2120
        %2153 = vst [vmem:[%s340 + $0x40] sm:$0xff] %v2121
        %2154 = vst [vmem:[%s340 + $0x48] sm:$0xff] %v2122
        %2155 = vst [vmem:[%s340 + $0x50] sm:$0xff] %v2123
        %2156 = vst [vmem:[%s340 + $0x58] sm:$0xff] %v2124
        %2157 = vst [vmem:[%s340 + $0x60] sm:$0xff] %v2125
        %2158 = vst [vmem:[%s340 + $0x68] sm:$0xff] %v2126
        %2159 = vst [vmem:[%s340 + $0x70] sm:$0xff] %v2127
        %2160 = vst [vmem:[%s340 + $0x78] sm:$0xff] %v2128
        %2161 = vst [vmem:[%s340 + $0x80] sm:$0xff] %v2129
        %2162 = vst [vmem:[%s340 + $0x88] sm:$0xff] %v2130
        %2163 = vst [vmem:[%s340 + $0x90] sm:$0xff] %v2131
        %2164 = vst [vmem:[%s340 + $0x98] sm:$0xff] %v2132
        %2165 = vst [vmem:[%s340 + $0xa0] sm:$0xff] %v2133
        %2166 = vst [vmem:[%s340 + $0xa8] sm:$0xff] %v2134
        %2167 = vst [vmem:[%s340 + $0xb0] sm:$0xff] %v2135
        %2168 = vst [vmem:[%s340 + $0xb8] sm:$0xff] %v2136
        %2169 = vst [vmem:[%s340 + $0xc0] sm:$0xff] %v2137
        %2170 = vst [vmem:[%s340 + $0xc8] sm:$0xff] %v2138
        %2171 = vst [vmem:[%s340 + $0xd0] sm:$0xff] %v2139
        %2172 = vst [vmem:[%s340 + $0xd8] sm:$0xff] %v2140
        %2173 = vst [vmem:[%s340 + $0xe0] sm:$0xff] %v2141
        %2174 = vst [vmem:[%s340 + $0xe8] sm:$0xff] %v2142
        %2175 = vst [vmem:[%s340 + $0xf0] sm:$0xff] %v2143
        %2176 = vst [vmem:[%s340 + $0xf8] sm:$0xff] %v2144
        %s2177 = sand.u32 %s186, 1
        %s2178 = scalar_lea.sflag [#allocation4], %s2177
        %s2179 = sand.u32 %s186, 1
        %s2180 = smul.addr %s2179, 256
        %s2181 = scalar_lea.vmem [#allocation10], %s2180
        // Predicated region
        $region65: #{tpu_custom_call.1} parent=47 // pred_check
          %p2182 = pneg %p196
        $region66: #{tpu_custom_call.1} parent=47 // pred_check_branch
          %2184 = sbr.rel (%p2182) target = $region68
        $region67: #{tpu_custom_call.1} parent=47 // pred_region
          %s2185 = smul.u32 32, %s26
          %s2187 = ssub.s32 4096, 4096
          %2188 = vsyncadd %s2178, %s2187
          %s2189 = smul.addr %s2185, 128
          %s2190 = scalar_lea.hbm %s7, %s2189
          %s2191 = sshll.u32 %s2181, 4
          %s2192 = int_to_ptr.vmem [resolvable:$true] %s2191
          %2197 = dma.vmem_to_hbm [thread:$0]  %s2192, 4096, %s2190, %s2178, 128, 128, 8
        $region68: #{tpu_custom_call.1} parent=47 // pred_fallthru
          _
      $region48: #{tpu_custom_call.1} parent=5 // pred_fallthru
        _
      %p2198 = scmp.le.s32.totalorder 2, %s21
      // Predicated region
      $region69: #{tpu_custom_call.1} parent=5 // pred_check
        %p2199 = pneg %p2198
      $region70: #{tpu_custom_call.1} parent=5 // pred_check_branch
        %2201 = sbr.rel (%p2199) target = $region72
      $region71: #{tpu_custom_call.1} parent=5 // pred_region
        %s2202 = ssub.s32 %s21, 2
        // Predicated region
        $region73: #{tpu_custom_call.1} parent=71 // pred_check
          %p2203 = pneg %p202
        $region74: #{tpu_custom_call.1} parent=71 // pred_check_branch
          %2205 = sbr.rel (%p2203) target = $region76
        $region75: #{tpu_custom_call.1} parent=71 // pred_region
          %s2206 = sand.u32 %s187, 1
          %s2207 = scalar_lea.sflag [#allocation4], %s2206
          %s2208 = sand.u32 %s187, 1
          %s2209 = smul.addr %s2208, 256
          %s2210 = scalar_lea.vmem [#allocation10], %s2209
          %2211 = dma.done %s2207, 4096
        $region76: #{tpu_custom_call.1} parent=71 // pred_fallthru
          _
      $region72: #{tpu_custom_call.1} parent=5 // pred_fallthru
        _
    $region6: #{tpu_custom_call.1} parent=1 // loop_footer
      %s25 = sadd.s32 1, %s21
    $region7: #{tpu_custom_call.1} parent=1 // loop_footer_branch
      %20 = sbr.rel target = $region3
    $region8: #{tpu_custom_call.1} parent=1 // loop_exit
      _
    %2212 = vsyncpa [#allocation3], 1
    %s2213 = scalar_lea.sflag [#allocation3], 1
    %2214 = vsyncpa %s2213, 1
    %2215 = vsyncpa [#allocation6], 1
    %2216 = vsyncpa [#allocation9], 1
    %2217 = vsyncpa [#allocation4], 1
    %s2218 = scalar_lea.sflag [#allocation4], 1
    %2219 = vsyncpa %s2218, 1

</llo_original>
